<compile_context>
chip_gen: v5e
topology: v5e:2x2
jax: 0.10.0
libtpu: 0.0.40
codegen_flags: <defaults>
</compile_context>

<pallas_src>
import math

import jax
import jax.numpy as jnp
from jax.experimental import pallas as pl
from jax.experimental.pallas import tpu as pltpu

# ----------------------------- model hyperparameters -----------------------------
BATCH = 2
IN_CH = 4
IMG = 16
PATCH = 8
HP = IMG // PATCH            # patches per side = 2
NUM_PATCHES = HP * HP        # 4
SEQ = NUM_PATCHES + 2        # + cls + dist tokens = 6
EMBED = 32
NUM_HEADS = 2
HEAD_DIM = EMBED // NUM_HEADS
MLP_HIDDEN = 2 * EMBED
DEPTH = 2
TARGET_SIZE = 10
LN_EPS = 1e-6

KRAW = IN_CH * PATCH * PATCH          # 256 flattened patch pixels
KAUG = KRAW + 3                       # + [conv-bias flag, cls flag, dist flag]
KPAD = ((KAUG + 127) // 128) * 128    # 384, lane aligned (zero padded)


# --------------------------------- fused Pallas kernel ---------------------------------
def _deit_fused_kernel(
    x_ref, waug_ref, pos_ref,
    ln1_g_ref, ln1_b_ref, qkv_w_ref, qkv_b_ref, proj_w_ref, proj_b_ref,
    ln2_g_ref, ln2_b_ref, fc1_w_ref, fc1_b_ref, fc2_w_ref, fc2_b_ref,
    lnf_g_ref, lnf_b_ref, head_w_ref, head_dist_w_ref, head_b_ref,
    o_ref,
):
    """One grid step = one batch element. Everything VMEM-resident."""
    f32 = jnp.float32
    scale = f32(HEAD_DIM ** -0.5)
    inv_sqrt2 = f32(1.0 / math.sqrt(2.0))

    def layernorm(x, g, b):
        mean = jnp.mean(x, axis=-1, keepdims=True)
        var = jnp.mean(jnp.square(x - mean), axis=-1, keepdims=True)
        return (x - mean) * jax.lax.rsqrt(var + f32(LN_EPS)) * g + b

    def gelu(x):  # exact (erf) GELU, matching torch.nn.GELU default
        return f32(0.5) * x * (f32(1.0) + jax.lax.erf(x * inv_sqrt2))

    # --- token embedding: patch-embed conv + cls/dist tokens + pos, one matmul ---
    z = jnp.dot(x_ref[...], waug_ref[...], preferred_element_type=f32) + pos_ref[...]  # [S, E]

    # --- transformer blocks (statically unrolled) ---
    for d in range(DEPTH):
        # multi-head self-attention
        y = layernorm(z, ln1_g_ref[d], ln1_b_ref[d])
        qkv = jnp.dot(y, qkv_w_ref[d], preferred_element_type=f32) + qkv_b_ref[d]       # [S, 3E]
        proj_w = proj_w_ref[d]                                                          # [E, E]
        attn = jnp.zeros((SEQ, EMBED), f32) + proj_b_ref[d]                             # [S, E]
        for h in range(NUM_HEADS):
            c0 = h * HEAD_DIM
            q = qkv[:, c0:c0 + HEAD_DIM] * scale                                        # [S, Dh]
            k = qkv[:, EMBED + c0:EMBED + c0 + HEAD_DIM]                                # [S, Dh]
            v = qkv[:, 2 * EMBED + c0:2 * EMBED + c0 + HEAD_DIM]                        # [S, Dh]
            s = jnp.dot(q, k.T, preferred_element_type=f32)                             # [S, S]
            s = s - jnp.max(s, axis=-1, keepdims=True)
            p = jnp.exp(s)
            p = p * pl.reciprocal(jnp.sum(p, axis=-1, keepdims=True), approx=True)
            oh = jnp.dot(p, v, preferred_element_type=f32)                              # [S, Dh]
            # fold the output projection in per head: no lane concat needed
            attn = attn + jnp.dot(oh, proj_w[c0:c0 + HEAD_DIM, :],
                                  preferred_element_type=f32)
        z = z + attn

        # MLP
        y = layernorm(z, ln2_g_ref[d], ln2_b_ref[d])
        h1 = gelu(jnp.dot(y, fc1_w_ref[d], preferred_element_type=f32) + fc1_b_ref[d])  # [S, H]
        z = z + jnp.dot(h1, fc2_w_ref[d], preferred_element_type=f32) + fc2_b_ref[d]

    # --- final LN + merged distilled heads ---
    zf = layernorm(z, lnf_g_ref[...], lnf_b_ref[...])
    logits = (jnp.dot(zf[0:1, :], head_w_ref[...], preferred_element_type=f32)
              + jnp.dot(zf[1:2, :], head_dist_w_ref[...], preferred_element_type=f32)
              + head_b_ref[...]) * f32(0.5)                                             # [1, T]
    o_ref[...] = logits.astype(o_ref.dtype)


def _bcast_spec(shape):
    """Whole-array block, same block for every grid step (weights stay VMEM-resident)."""
    n = len(shape)
    return pl.BlockSpec(shape, lambda b: (0,) * n)


# ------------------------------- parameter creation -------------------------------
def init_params(key):
    keys = iter(jax.random.split(key, 64))

    def nrm(shape, std=0.02):
        return jax.random.normal(next(keys), shape, jnp.float32) * std

    def zeros(shape):
        return jnp.zeros(shape, jnp.float32)

    def ones(shape):
        return jnp.ones(shape, jnp.float32)

    params = dict(
        # patch-embed conv [D, C, P, P] flattened to a matmul weight [C*P*P, D]
        pe_w=nrm((KRAW, EMBED)),
        pe_b=zeros((EMBED,)),
        cls=nrm((1, 1, EMBED)),
        dist=nrm((1, 1, EMBED)),
        pos=nrm((1, SEQ, EMBED)),
        # per-block params stacked along a leading DEPTH axis
        ln1_g=ones((DEPTH, 1, EMBED)), ln1_b=zeros((DEPTH, 1, EMBED)),
        qkv_w=nrm((DEPTH, EMBED, 3 * EMBED)), qkv_b=zeros((DEPTH, 1, 3 * EMBED)),
        proj_w=nrm((DEPTH, EMBED, EMBED)), proj_b=zeros((DEPTH, 1, EMBED)),
        ln2_g=ones((DEPTH, 1, EMBED)), ln2_b=zeros((DEPTH, 1, EMBED)),
        fc1_w=nrm((DEPTH, EMBED, MLP_HIDDEN)), fc1_b=zeros((DEPTH, 1, MLP_HIDDEN)),
        fc2_w=nrm((DEPTH, MLP_HIDDEN, EMBED)), fc2_b=zeros((DEPTH, 1, EMBED)),
        ln_g=ones((EMBED,)), ln_b=zeros((EMBED,)),
        head_w=nrm((EMBED, TARGET_SIZE)), head_b=zeros((TARGET_SIZE,)),
        head_dist_w=nrm((EMBED, TARGET_SIZE)), head_dist_b=zeros((TARGET_SIZE,)),
    )
    return params


# ----------------------------------- forward --------------------------------------
def forward(params, x):
    # x: [B, C, H, W] float32 (NCHW, like PyTorch)
    B, C, H, W = x.shape
    P = PATCH
    Hp, Wp = H // P, W // P
    NP = Hp * Wp

    # Patch extraction: equivalent to Conv2d(kernel=stride=P); flatten order (c, ph, pw)
    # matches the PyTorch conv-weight flattening order; token order is (hp, wp) row-major.
    patches = (
        x.reshape(B, C, Hp, P, Wp, P)
         .transpose(0, 2, 4, 1, 3, 5)
         .reshape(B, NP, C * P * P)
    )

    # Augmented embedding input: [patch pixels | conv-bias flag | cls flag | dist flag]
    patch_rows = jnp.concatenate(
        [patches,
         jnp.ones((B, NP, 1), jnp.float32),     # conv bias applies to patch tokens only
         jnp.zeros((B, NP, 2), jnp.float32)], axis=-1)
    cls_row = jnp.zeros((B, 1, KAUG), jnp.float32).at[:, :, KRAW + 1].set(1.0)
    dist_row = jnp.zeros((B, 1, KAUG), jnp.float32).at[:, :, KRAW + 2].set(1.0)
    x_aug = jnp.concatenate([cls_row, dist_row, patch_rows], axis=1)       # [B, S, KAUG]
    x_aug = jnp.pad(x_aug, ((0, 0), (0, 0), (0, KPAD - KAUG)))             # lane-align K

    # Augmented weight: [pe_w ; pe_b ; cls_token ; dist_token], zero-padded rows
    w_aug = jnp.concatenate(
        [params["pe_w"],
         params["pe_b"][None, :],
         params["cls"].reshape(1, EMBED),
         params["dist"].reshape(1, EMBED)], axis=0)
    w_aug = jnp.pad(w_aug, ((0, KPAD - KAUG), (0, 0)))                     # [KPAD, E]

    pos = params["pos"].reshape(SEQ, EMBED)
    lnf_g = params["ln_g"].reshape(1, EMBED)
    lnf_b = params["ln_b"].reshape(1, EMBED)
    head_b = (params["head_b"] + params["head_dist_b"]).reshape(1, TARGET_SIZE)

    out = pl.pallas_call(
        _deit_fused_kernel,
        out_shape=jax.ShapeDtypeStruct((B, 1, TARGET_SIZE), jnp.float32),
        grid=(B,),
        in_specs=[
            pl.BlockSpec((None, SEQ, KPAD), lambda b: (b, 0, 0)),   # x_aug (per batch)
            _bcast_spec((KPAD, EMBED)),                             # w_aug
            _bcast_spec((SEQ, EMBED)),                              # pos
            _bcast_spec((DEPTH, 1, EMBED)),                         # ln1_g
            _bcast_spec((DEPTH, 1, EMBED)),                         # ln1_b
            _bcast_spec((DEPTH, EMBED, 3 * EMBED)),                 # qkv_w
            _bcast_spec((DEPTH, 1, 3 * EMBED)),                     # qkv_b
            _bcast_spec((DEPTH, EMBED, EMBED)),                     # proj_w
            _bcast_spec((DEPTH, 1, EMBED)),                         # proj_b
            _bcast_spec((DEPTH, 1, EMBED)),                         # ln2_g
            _bcast_spec((DEPTH, 1, EMBED)),                         # ln2_b
            _bcast_spec((DEPTH, EMBED, MLP_HIDDEN)),                # fc1_w
            _bcast_spec((DEPTH, 1, MLP_HIDDEN)),                    # fc1_b
            _bcast_spec((DEPTH, MLP_HIDDEN, EMBED)),                # fc2_w
            _bcast_spec((DEPTH, 1, EMBED)),                         # fc2_b
            _bcast_spec((1, EMBED)),                                # final ln gamma
            _bcast_spec((1, EMBED)),                                # final ln beta
            _bcast_spec((EMBED, TARGET_SIZE)),                      # head_w
            _bcast_spec((EMBED, TARGET_SIZE)),                      # head_dist_w
            _bcast_spec((1, TARGET_SIZE)),                          # head_b + head_dist_b
        ],
        out_specs=pl.BlockSpec((None, 1, TARGET_SIZE), lambda b: (b, 0, 0)),
        compiler_params=pltpu.CompilerParams(
            dimension_semantics=("parallel",)),  # batch axis -> 2 TCs on v7x
    )(
        x_aug, w_aug, pos,
        params["ln1_g"], params["ln1_b"], params["qkv_w"], params["qkv_b"],
        params["proj_w"], params["proj_b"], params["ln2_g"], params["ln2_b"],
        params["fc1_w"], params["fc1_b"], params["fc2_w"], params["fc2_b"],
        lnf_g, lnf_b, params["head_w"], params["head_dist_w"], head_b,
    )
    return out.reshape(B, TARGET_SIZE)   # (head(cls) + head_dist(dist)) / 2


# ------------------------------------ main -----------------------------------------
if __name__ == "__main__":
    key = jax.random.PRNGKey(0)
    pkey, xkey = jax.random.split(key)
    params = init_params(pkey)
    x = jax.random.normal(xkey, (BATCH, IN_CH, IMG, IMG), jnp.float32)

    out = jax.jit(forward)(params, x)
    out = jax.block_until_ready(out)
    assert out.shape == (BATCH, TARGET_SIZE), out.shape
    assert jnp.all(jnp.isfinite(out))
    print("KERNEL_OK")
</pallas_src>

<mosaic_0001>
module attributes {stable_mosaic.version = 11 : i64} {
  func.func @_deit_fused_kernel(%arg0: i32, %arg1: memref<1x6x384xf32, #tpu.memory_space<vmem>>, %arg2: memref<384x32xf32, #tpu.memory_space<vmem>>, %arg3: memref<6x32xf32, #tpu.memory_space<vmem>>, %arg4: memref<2x1x32xf32, #tpu.memory_space<vmem>>, %arg5: memref<2x1x32xf32, #tpu.memory_space<vmem>>, %arg6: memref<2x32x96xf32, #tpu.memory_space<vmem>>, %arg7: memref<2x1x96xf32, #tpu.memory_space<vmem>>, %arg8: memref<2x32x32xf32, #tpu.memory_space<vmem>>, %arg9: memref<2x1x32xf32, #tpu.memory_space<vmem>>, %arg10: memref<2x1x32xf32, #tpu.memory_space<vmem>>, %arg11: memref<2x1x32xf32, #tpu.memory_space<vmem>>, %arg12: memref<2x32x64xf32, #tpu.memory_space<vmem>>, %arg13: memref<2x1x64xf32, #tpu.memory_space<vmem>>, %arg14: memref<2x64x32xf32, #tpu.memory_space<vmem>>, %arg15: memref<2x1x32xf32, #tpu.memory_space<vmem>>, %arg16: memref<1x32xf32, #tpu.memory_space<vmem>>, %arg17: memref<1x32xf32, #tpu.memory_space<vmem>>, %arg18: memref<32x10xf32, #tpu.memory_space<vmem>>, %arg19: memref<32x10xf32, #tpu.memory_space<vmem>>, %arg20: memref<1x10xf32, #tpu.memory_space<vmem>>, %arg21: memref<1x1x10xf32, #tpu.memory_space<vmem>>) attributes {dimension_semantics = [#tpu.dimension_semantics<parallel>], iteration_bounds = array<i64: 2>, scalar_prefetch = 0 : i64, scratch_operands = 0 : i64, tpu.core_type = #tpu.core_type<tc>, window_params = [{transform_indices = @transform_0, window_bounds = array<i64: 1, 6, 384>}, {pipeline_mode = #tpu.pipeline_mode<synchronous>, transform_indices = @transform_1, window_bounds = array<i64: 384, 32>}, {pipeline_mode = #tpu.pipeline_mode<synchronous>, transform_indices = @transform_2, window_bounds = array<i64: 6, 32>}, {pipeline_mode = #tpu.pipeline_mode<synchronous>, transform_indices = @transform_3, window_bounds = array<i64: 2, 1, 32>}, {pipeline_mode = #tpu.pipeline_mode<synchronous>, transform_indices = @transform_4, window_bounds = array<i64: 2, 1, 32>}, {pipeline_mode = #tpu.pipeline_mode<synchronous>, transform_indices = @transform_5, window_bounds = array<i64: 2, 32, 96>}, {pipeline_mode = #tpu.pipeline_mode<synchronous>, transform_indices = @transform_6, window_bounds = array<i64: 2, 1, 96>}, {pipeline_mode = #tpu.pipeline_mode<synchronous>, transform_indices = @transform_7, window_bounds = array<i64: 2, 32, 32>}, {pipeline_mode = #tpu.pipeline_mode<synchronous>, transform_indices = @transform_8, window_bounds = array<i64: 2, 1, 32>}, {pipeline_mode = #tpu.pipeline_mode<synchronous>, transform_indices = @transform_9, window_bounds = array<i64: 2, 1, 32>}, {pipeline_mode = #tpu.pipeline_mode<synchronous>, transform_indices = @transform_10, window_bounds = array<i64: 2, 1, 32>}, {pipeline_mode = #tpu.pipeline_mode<synchronous>, transform_indices = @transform_11, window_bounds = array<i64: 2, 32, 64>}, {pipeline_mode = #tpu.pipeline_mode<synchronous>, transform_indices = @transform_12, window_bounds = array<i64: 2, 1, 64>}, {pipeline_mode = #tpu.pipeline_mode<synchronous>, transform_indices = @transform_13, window_bounds = array<i64: 2, 64, 32>}, {pipeline_mode = #tpu.pipeline_mode<synchronous>, transform_indices = @transform_14, window_bounds = array<i64: 2, 1, 32>}, {pipeline_mode = #tpu.pipeline_mode<synchronous>, transform_indices = @transform_15, window_bounds = array<i64: 1, 32>}, {pipeline_mode = #tpu.pipeline_mode<synchronous>, transform_indices = @transform_16, window_bounds = array<i64: 1, 32>}, {pipeline_mode = #tpu.pipeline_mode<synchronous>, transform_indices = @transform_17, window_bounds = array<i64: 32, 10>}, {pipeline_mode = #tpu.pipeline_mode<synchronous>, transform_indices = @transform_18, window_bounds = array<i64: 32, 10>}, {pipeline_mode = #tpu.pipeline_mode<synchronous>, transform_indices = @transform_19, window_bounds = array<i64: 1, 10>}, {transform_indices = @transform_20, window_bounds = array<i64: 1, 1, 10>}]} {
    %c0 = arith.constant 0 : index
    %c0_0 = arith.constant 0 : index
    %c0_1 = arith.constant 0 : index
    %0 = vector.load %arg1[%c0, %c0_0, %c0_1] : memref<1x6x384xf32, #tpu.memory_space<vmem>>, vector<1x6x384xf32>
    %1 = vector.shape_cast %0 : vector<1x6x384xf32> to vector<6x384xf32>
    %c0_2 = arith.constant 0 : index
    %c0_3 = arith.constant 0 : index
    %2 = vector.load %arg2[%c0_2, %c0_3] : memref<384x32xf32, #tpu.memory_space<vmem>>, vector<384x32xf32>
    %cst = arith.constant dense<0.000000e+00> : vector<6x32xf32>
    %3 = tpu.matmul %1, %2, %cst {dimension_numbers = #tpu.dot_dimension_numbers<[1], [0], [0], [1], [0, 0, 1, 1], [], []>} : vector<6x384xf32>, vector<384x32xf32>, vector<6x32xf32> -> vector<6x32xf32>
    %c0_4 = arith.constant 0 : index
    %c0_5 = arith.constant 0 : index
    %4 = vector.load %arg3[%c0_4, %c0_5] : memref<6x32xf32, #tpu.memory_space<vmem>>, vector<6x32xf32>
    %5 = arith.addf %3, %4 : vector<6x32xf32>
    %c0_6 = arith.constant 0 : index
    %c0_7 = arith.constant 0 : index
    %c0_8 = arith.constant 0 : index
    %6 = vector.load %arg4[%c0_6, %c0_7, %c0_8] : memref<2x1x32xf32, #tpu.memory_space<vmem>>, vector<1x1x32xf32>
    %7 = vector.shape_cast %6 : vector<1x1x32xf32> to vector<1x32xf32>
    %c0_9 = arith.constant 0 : index
    %c0_10 = arith.constant 0 : index
    %c0_11 = arith.constant 0 : index
    %8 = vector.load %arg5[%c0_9, %c0_10, %c0_11] : memref<2x1x32xf32, #tpu.memory_space<vmem>>, vector<1x1x32xf32>
    %9 = vector.shape_cast %8 : vector<1x1x32xf32> to vector<1x32xf32>
    %cst_12 = arith.constant dense<0.000000e+00> : vector<6xf32>
    %10 = vector.multi_reduction <add>, %5, %cst_12 [1] : vector<6x32xf32> to vector<6xf32>
    %11 = vector.shape_cast %10 : vector<6xf32> to vector<6x1xf32>
    %cst_13 = arith.constant 3.200000e+01 : f32
    %12 = vector.broadcast %cst_13 : f32 to vector<6x1xf32>
    %13 = arith.divf %11, %12 : vector<6x1xf32>
    %14 = vector.broadcast %13 : vector<6x1xf32> to vector<6x32xf32>
    %15 = arith.subf %5, %14 : vector<6x32xf32>
    %16 = arith.mulf %15, %15 : vector<6x32xf32>
    %cst_14 = arith.constant dense<0.000000e+00> : vector<6xf32>
    %17 = vector.multi_reduction <add>, %16, %cst_14 [1] : vector<6x32xf32> to vector<6xf32>
    %18 = vector.shape_cast %17 : vector<6xf32> to vector<6x1xf32>
    %cst_15 = arith.constant 3.200000e+01 : f32
    %19 = vector.broadcast %cst_15 : f32 to vector<6x1xf32>
    %20 = arith.divf %18, %19 : vector<6x1xf32>
    %21 = vector.broadcast %13 : vector<6x1xf32> to vector<6x32xf32>
    %22 = arith.subf %5, %21 : vector<6x32xf32>
    %cst_16 = arith.constant 9.99999997E-7 : f32
    %23 = vector.broadcast %cst_16 : f32 to vector<6x1xf32>
    %24 = arith.addf %20, %23 : vector<6x1xf32>
    %25 = math.rsqrt %24 : vector<6x1xf32>
    %26 = vector.broadcast %25 : vector<6x1xf32> to vector<6x32xf32>
    %27 = arith.mulf %22, %26 : vector<6x32xf32>
    %28 = vector.broadcast %7 : vector<1x32xf32> to vector<6x32xf32>
    %29 = arith.mulf %27, %28 : vector<6x32xf32>
    %30 = vector.broadcast %9 : vector<1x32xf32> to vector<6x32xf32>
    %31 = arith.addf %29, %30 : vector<6x32xf32>
    %c0_17 = arith.constant 0 : index
    %c0_18 = arith.constant 0 : index
    %c0_19 = arith.constant 0 : index
    %32 = vector.load %arg6[%c0_17, %c0_18, %c0_19] : memref<2x32x96xf32, #tpu.memory_space<vmem>>, vector<1x32x96xf32>
    %33 = vector.shape_cast %32 : vector<1x32x96xf32> to vector<32x96xf32>
    %cst_20 = arith.constant dense<0.000000e+00> : vector<6x96xf32>
    %34 = tpu.matmul %31, %33, %cst_20 {dimension_numbers = #tpu.dot_dimension_numbers<[1], [0], [0], [1], [0, 0, 1, 1], [], []>} : vector<6x32xf32>, vector<32x96xf32>, vector<6x96xf32> -> vector<6x96xf32>
    %c0_21 = arith.constant 0 : index
    %c0_22 = arith.constant 0 : index
    %c0_23 = arith.constant 0 : index
    %35 = vector.load %arg7[%c0_21, %c0_22, %c0_23] : memref<2x1x96xf32, #tpu.memory_space<vmem>>, vector<1x1x96xf32>
    %36 = vector.shape_cast %35 : vector<1x1x96xf32> to vector<1x96xf32>
    %37 = vector.broadcast %36 : vector<1x96xf32> to vector<6x96xf32>
    %38 = arith.addf %34, %37 : vector<6x96xf32>
    %c0_24 = arith.constant 0 : index
    %c0_25 = arith.constant 0 : index
    %c0_26 = arith.constant 0 : index
    %39 = vector.load %arg8[%c0_24, %c0_25, %c0_26] : memref<2x32x32xf32, #tpu.memory_space<vmem>>, vector<1x32x32xf32>
    %40 = vector.shape_cast %39 : vector<1x32x32xf32> to vector<32x32xf32>
    %cst_27 = arith.constant 0.000000e+00 : f32
    %41 = vector.broadcast %cst_27 : f32 to vector<6x32xf32>
    %c0_28 = arith.constant 0 : index
    %c0_29 = arith.constant 0 : index
    %c0_30 = arith.constant 0 : index
    %42 = vector.load %arg9[%c0_28, %c0_29, %c0_30] : memref<2x1x32xf32, #tpu.memory_space<vmem>>, vector<1x1x32xf32>
    %43 = vector.shape_cast %42 : vector<1x1x32xf32> to vector<1x32xf32>
    %44 = vector.broadcast %43 : vector<1x32xf32> to vector<6x32xf32>
    %45 = arith.addf %41, %44 : vector<6x32xf32>
    %46 = vector.extract_strided_slice %38 {offsets = [0, 0], sizes = [6, 16], strides = [1, 1]} : vector<6x96xf32> to vector<6x16xf32>
    %cst_31 = arith.constant 2.500000e-01 : f32
    %47 = vector.broadcast %cst_31 : f32 to vector<6x16xf32>
    %48 = arith.mulf %46, %47 : vector<6x16xf32>
    %49 = vector.extract_strided_slice %38 {offsets = [0, 32], sizes = [6, 16], strides = [1, 1]} : vector<6x96xf32> to vector<6x16xf32>
    %50 = vector.extract_strided_slice %38 {offsets = [0, 64], sizes = [6, 16], strides = [1, 1]} : vector<6x96xf32> to vector<6x16xf32>
    %51 = tpu.transpose %49, [1, 0] : vector<6x16xf32> -> vector<16x6xf32>
    %cst_32 = arith.constant dense<0.000000e+00> : vector<6x6xf32>
    %52 = tpu.matmul %48, %51, %cst_32 {dimension_numbers = #tpu.dot_dimension_numbers<[1], [0], [0], [1], [0, 0, 1, 1], [], []>} : vector<6x16xf32>, vector<16x6xf32>, vector<6x6xf32> -> vector<6x6xf32>
    %cst_33 = arith.constant dense<0xFF800000> : vector<6xf32>
    %53 = vector.multi_reduction <maximumf>, %52, %cst_33 [1] : vector<6x6xf32> to vector<6xf32>
    %54 = vector.shape_cast %53 : vector<6xf32> to vector<6x1xf32>
    %55 = vector.broadcast %54 : vector<6x1xf32> to vector<6x6xf32>
    %56 = arith.subf %52, %55 : vector<6x6xf32>
    %57 = math.exp %56 : vector<6x6xf32>
    %cst_34 = arith.constant dense<0.000000e+00> : vector<6xf32>
    %58 = vector.multi_reduction <add>, %57, %cst_34 [1] : vector<6x6xf32> to vector<6xf32>
    %59 = vector.shape_cast %58 : vector<6xf32> to vector<6x1xf32>
    %60 = tpu.reciprocal %59 {approx = true} : vector<6x1xf32> -> vector<6x1xf32>
    %61 = vector.broadcast %60 : vector<6x1xf32> to vector<6x6xf32>
    %62 = arith.mulf %57, %61 : vector<6x6xf32>
    %cst_35 = arith.constant dense<0.000000e+00> : vector<6x16xf32>
    %63 = tpu.matmul %62, %50, %cst_35 {dimension_numbers = #tpu.dot_dimension_numbers<[1], [0], [0], [1], [0, 0, 1, 1], [], []>} : vector<6x6xf32>, vector<6x16xf32>, vector<6x16xf32> -> vector<6x16xf32>
    %64 = vector.extract_strided_slice %40 {offsets = [0, 0], sizes = [16, 32], strides = [1, 1]} : vector<32x32xf32> to vector<16x32xf32>
    %cst_36 = arith.constant dense<0.000000e+00> : vector<6x32xf32>
    %65 = tpu.matmul %63, %64, %cst_36 {dimension_numbers = #tpu.dot_dimension_numbers<[1], [0], [0], [1], [0, 0, 1, 1], [], []>} : vector<6x16xf32>, vector<16x32xf32>, vector<6x32xf32> -> vector<6x32xf32>
    %66 = arith.addf %45, %65 : vector<6x32xf32>
    %67 = vector.extract_strided_slice %38 {offsets = [0, 16], sizes = [6, 16], strides = [1, 1]} : vector<6x96xf32> to vector<6x16xf32>
    %cst_37 = arith.constant 2.500000e-01 : f32
    %68 = vector.broadcast %cst_37 : f32 to vector<6x16xf32>
    %69 = arith.mulf %67, %68 : vector<6x16xf32>
    %70 = vector.extract_strided_slice %38 {offsets = [0, 48], sizes = [6, 16], strides = [1, 1]} : vector<6x96xf32> to vector<6x16xf32>
    %71 = vector.extract_strided_slice %38 {offsets = [0, 80], sizes = [6, 16], strides = [1, 1]} : vector<6x96xf32> to vector<6x16xf32>
    %72 = tpu.transpose %70, [1, 0] : vector<6x16xf32> -> vector<16x6xf32>
    %cst_38 = arith.constant dense<0.000000e+00> : vector<6x6xf32>
    %73 = tpu.matmul %69, %72, %cst_38 {dimension_numbers = #tpu.dot_dimension_numbers<[1], [0], [0], [1], [0, 0, 1, 1], [], []>} : vector<6x16xf32>, vector<16x6xf32>, vector<6x6xf32> -> vector<6x6xf32>
    %cst_39 = arith.constant dense<0xFF800000> : vector<6xf32>
    %74 = vector.multi_reduction <maximumf>, %73, %cst_39 [1] : vector<6x6xf32> to vector<6xf32>
    %75 = vector.shape_cast %74 : vector<6xf32> to vector<6x1xf32>
    %76 = vector.broadcast %75 : vector<6x1xf32> to vector<6x6xf32>
    %77 = arith.subf %73, %76 : vector<6x6xf32>
    %78 = math.exp %77 : vector<6x6xf32>
    %cst_40 = arith.constant dense<0.000000e+00> : vector<6xf32>
    %79 = vector.multi_reduction <add>, %78, %cst_40 [1] : vector<6x6xf32> to vector<6xf32>
    %80 = vector.shape_cast %79 : vector<6xf32> to vector<6x1xf32>
    %81 = tpu.reciprocal %80 {approx = true} : vector<6x1xf32> -> vector<6x1xf32>
    %82 = vector.broadcast %81 : vector<6x1xf32> to vector<6x6xf32>
    %83 = arith.mulf %78, %82 : vector<6x6xf32>
    %cst_41 = arith.constant dense<0.000000e+00> : vector<6x16xf32>
    %84 = tpu.matmul %83, %71, %cst_41 {dimension_numbers = #tpu.dot_dimension_numbers<[1], [0], [0], [1], [0, 0, 1, 1], [], []>} : vector<6x6xf32>, vector<6x16xf32>, vector<6x16xf32> -> vector<6x16xf32>
    %85 = vector.extract_strided_slice %40 {offsets = [16, 0], sizes = [16, 32], strides = [1, 1]} : vector<32x32xf32> to vector<16x32xf32>
    %cst_42 = arith.constant dense<0.000000e+00> : vector<6x32xf32>
    %86 = tpu.matmul %84, %85, %cst_42 {dimension_numbers = #tpu.dot_dimension_numbers<[1], [0], [0], [1], [0, 0, 1, 1], [], []>} : vector<6x16xf32>, vector<16x32xf32>, vector<6x32xf32> -> vector<6x32xf32>
    %87 = arith.addf %66, %86 : vector<6x32xf32>
    %88 = arith.addf %5, %87 : vector<6x32xf32>
    %c0_43 = arith.constant 0 : index
    %c0_44 = arith.constant 0 : index
    %c0_45 = arith.constant 0 : index
    %89 = vector.load %arg10[%c0_43, %c0_44, %c0_45] : memref<2x1x32xf32, #tpu.memory_space<vmem>>, vector<1x1x32xf32>
    %90 = vector.shape_cast %89 : vector<1x1x32xf32> to vector<1x32xf32>
    %c0_46 = arith.constant 0 : index
    %c0_47 = arith.constant 0 : index
    %c0_48 = arith.constant 0 : index
    %91 = vector.load %arg11[%c0_46, %c0_47, %c0_48] : memref<2x1x32xf32, #tpu.memory_space<vmem>>, vector<1x1x32xf32>
    %92 = vector.shape_cast %91 : vector<1x1x32xf32> to vector<1x32xf32>
    %cst_49 = arith.constant dense<0.000000e+00> : vector<6xf32>
    %93 = vector.multi_reduction <add>, %88, %cst_49 [1] : vector<6x32xf32> to vector<6xf32>
    %94 = vector.shape_cast %93 : vector<6xf32> to vector<6x1xf32>
    %cst_50 = arith.constant 3.200000e+01 : f32
    %95 = vector.broadcast %cst_50 : f32 to vector<6x1xf32>
    %96 = arith.divf %94, %95 : vector<6x1xf32>
    %97 = vector.broadcast %96 : vector<6x1xf32> to vector<6x32xf32>
    %98 = arith.subf %88, %97 : vector<6x32xf32>
    %99 = arith.mulf %98, %98 : vector<6x32xf32>
    %cst_51 = arith.constant dense<0.000000e+00> : vector<6xf32>
    %100 = vector.multi_reduction <add>, %99, %cst_51 [1] : vector<6x32xf32> to vector<6xf32>
    %101 = vector.shape_cast %100 : vector<6xf32> to vector<6x1xf32>
    %cst_52 = arith.constant 3.200000e+01 : f32
    %102 = vector.broadcast %cst_52 : f32 to vector<6x1xf32>
    %103 = arith.divf %101, %102 : vector<6x1xf32>
    %104 = vector.broadcast %96 : vector<6x1xf32> to vector<6x32xf32>
    %105 = arith.subf %88, %104 : vector<6x32xf32>
    %cst_53 = arith.constant 9.99999997E-7 : f32
    %106 = vector.broadcast %cst_53 : f32 to vector<6x1xf32>
    %107 = arith.addf %103, %106 : vector<6x1xf32>
    %108 = math.rsqrt %107 : vector<6x1xf32>
    %109 = vector.broadcast %108 : vector<6x1xf32> to vector<6x32xf32>
    %110 = arith.mulf %105, %109 : vector<6x32xf32>
    %111 = vector.broadcast %90 : vector<1x32xf32> to vector<6x32xf32>
    %112 = arith.mulf %110, %111 : vector<6x32xf32>
    %113 = vector.broadcast %92 : vector<1x32xf32> to vector<6x32xf32>
    %114 = arith.addf %112, %113 : vector<6x32xf32>
    %c0_54 = arith.constant 0 : index
    %c0_55 = arith.constant 0 : index
    %c0_56 = arith.constant 0 : index
    %115 = vector.load %arg12[%c0_54, %c0_55, %c0_56] : memref<2x32x64xf32, #tpu.memory_space<vmem>>, vector<1x32x64xf32>
    %116 = vector.shape_cast %115 : vector<1x32x64xf32> to vector<32x64xf32>
    %cst_57 = arith.constant dense<0.000000e+00> : vector<6x64xf32>
    %117 = tpu.matmul %114, %116, %cst_57 {dimension_numbers = #tpu.dot_dimension_numbers<[1], [0], [0], [1], [0, 0, 1, 1], [], []>} : vector<6x32xf32>, vector<32x64xf32>, vector<6x64xf32> -> vector<6x64xf32>
    %c0_58 = arith.constant 0 : index
    %c0_59 = arith.constant 0 : index
    %c0_60 = arith.constant 0 : index
    %118 = vector.load %arg13[%c0_58, %c0_59, %c0_60] : memref<2x1x64xf32, #tpu.memory_space<vmem>>, vector<1x1x64xf32>
    %119 = vector.shape_cast %118 : vector<1x1x64xf32> to vector<1x64xf32>
    %120 = vector.broadcast %119 : vector<1x64xf32> to vector<6x64xf32>
    %121 = arith.addf %117, %120 : vector<6x64xf32>
    %cst_61 = arith.constant 5.000000e-01 : f32
    %122 = vector.broadcast %cst_61 : f32 to vector<6x64xf32>
    %123 = arith.mulf %122, %121 : vector<6x64xf32>
    %cst_62 = arith.constant 0.707106769 : f32
    %124 = vector.broadcast %cst_62 : f32 to vector<6x64xf32>
    %125 = arith.mulf %121, %124 : vector<6x64xf32>
    %126 = math.erf %125 : vector<6x64xf32>
    %cst_63 = arith.constant 1.000000e+00 : f32
    %127 = vector.broadcast %cst_63 : f32 to vector<6x64xf32>
    %128 = arith.addf %127, %126 : vector<6x64xf32>
    %129 = arith.mulf %123, %128 : vector<6x64xf32>
    %c0_64 = arith.constant 0 : index
    %c0_65 = arith.constant 0 : index
    %c0_66 = arith.constant 0 : index
    %130 = vector.load %arg14[%c0_64, %c0_65, %c0_66] : memref<2x64x32xf32, #tpu.memory_space<vmem>>, vector<1x64x32xf32>
    %131 = vector.shape_cast %130 : vector<1x64x32xf32> to vector<64x32xf32>
    %cst_67 = arith.constant dense<0.000000e+00> : vector<6x32xf32>
    %132 = tpu.matmul %129, %131, %cst_67 {dimension_numbers = #tpu.dot_dimension_numbers<[1], [0], [0], [1], [0, 0, 1, 1], [], []>} : vector<6x64xf32>, vector<64x32xf32>, vector<6x32xf32> -> vector<6x32xf32>
    %133 = arith.addf %88, %132 : vector<6x32xf32>
    %c0_68 = arith.constant 0 : index
    %c0_69 = arith.constant 0 : index
    %c0_70 = arith.constant 0 : index
    %134 = vector.load %arg15[%c0_68, %c0_69, %c0_70] : memref<2x1x32xf32, #tpu.memory_space<vmem>>, vector<1x1x32xf32>
    %135 = vector.shape_cast %134 : vector<1x1x32xf32> to vector<1x32xf32>
    %136 = vector.broadcast %135 : vector<1x32xf32> to vector<6x32xf32>
    %137 = arith.addf %133, %136 : vector<6x32xf32>
    %c1 = arith.constant 1 : index
    %c0_71 = arith.constant 0 : index
    %c0_72 = arith.constant 0 : index
    %138 = vector.load %arg4[%c1, %c0_71, %c0_72] : memref<2x1x32xf32, #tpu.memory_space<vmem>>, vector<1x1x32xf32>
    %139 = vector.shape_cast %138 : vector<1x1x32xf32> to vector<1x32xf32>
    %c1_73 = arith.constant 1 : index
    %c0_74 = arith.constant 0 : index
    %c0_75 = arith.constant 0 : index
    %140 = vector.load %arg5[%c1_73, %c0_74, %c0_75] : memref<2x1x32xf32, #tpu.memory_space<vmem>>, vector<1x1x32xf32>
    %141 = vector.shape_cast %140 : vector<1x1x32xf32> to vector<1x32xf32>
    %cst_76 = arith.constant dense<0.000000e+00> : vector<6xf32>
    %142 = vector.multi_reduction <add>, %137, %cst_76 [1] : vector<6x32xf32> to vector<6xf32>
    %143 = vector.shape_cast %142 : vector<6xf32> to vector<6x1xf32>
    %cst_77 = arith.constant 3.200000e+01 : f32
    %144 = vector.broadcast %cst_77 : f32 to vector<6x1xf32>
    %145 = arith.divf %143, %144 : vector<6x1xf32>
    %146 = vector.broadcast %145 : vector<6x1xf32> to vector<6x32xf32>
    %147 = arith.subf %137, %146 : vector<6x32xf32>
    %148 = arith.mulf %147, %147 : vector<6x32xf32>
    %cst_78 = arith.constant dense<0.000000e+00> : vector<6xf32>
    %149 = vector.multi_reduction <add>, %148, %cst_78 [1] : vector<6x32xf32> to vector<6xf32>
    %150 = vector.shape_cast %149 : vector<6xf32> to vector<6x1xf32>
    %cst_79 = arith.constant 3.200000e+01 : f32
    %151 = vector.broadcast %cst_79 : f32 to vector<6x1xf32>
    %152 = arith.divf %150, %151 : vector<6x1xf32>
    %153 = vector.broadcast %145 : vector<6x1xf32> to vector<6x32xf32>
    %154 = arith.subf %137, %153 : vector<6x32xf32>
    %cst_80 = arith.constant 9.99999997E-7 : f32
    %155 = vector.broadcast %cst_80 : f32 to vector<6x1xf32>
    %156 = arith.addf %152, %155 : vector<6x1xf32>
    %157 = math.rsqrt %156 : vector<6x1xf32>
    %158 = vector.broadcast %157 : vector<6x1xf32> to vector<6x32xf32>
    %159 = arith.mulf %154, %158 : vector<6x32xf32>
    %160 = vector.broadcast %139 : vector<1x32xf32> to vector<6x32xf32>
    %161 = arith.mulf %159, %160 : vector<6x32xf32>
    %162 = vector.broadcast %141 : vector<1x32xf32> to vector<6x32xf32>
    %163 = arith.addf %161, %162 : vector<6x32xf32>
    %c1_81 = arith.constant 1 : index
    %c0_82 = arith.constant 0 : index
    %c0_83 = arith.constant 0 : index
    %164 = vector.load %arg6[%c1_81, %c0_82, %c0_83] : memref<2x32x96xf32, #tpu.memory_space<vmem>>, vector<1x32x96xf32>
    %165 = vector.shape_cast %164 : vector<1x32x96xf32> to vector<32x96xf32>
    %cst_84 = arith.constant dense<0.000000e+00> : vector<6x96xf32>
    %166 = tpu.matmul %163, %165, %cst_84 {dimension_numbers = #tpu.dot_dimension_numbers<[1], [0], [0], [1], [0, 0, 1, 1], [], []>} : vector<6x32xf32>, vector<32x96xf32>, vector<6x96xf32> -> vector<6x96xf32>
    %c1_85 = arith.constant 1 : index
    %c0_86 = arith.constant 0 : index
    %c0_87 = arith.constant 0 : index
    %167 = vector.load %arg7[%c1_85, %c0_86, %c0_87] : memref<2x1x96xf32, #tpu.memory_space<vmem>>, vector<1x1x96xf32>
    %168 = vector.shape_cast %167 : vector<1x1x96xf32> to vector<1x96xf32>
    %169 = vector.broadcast %168 : vector<1x96xf32> to vector<6x96xf32>
    %170 = arith.addf %166, %169 : vector<6x96xf32>
    %c1_88 = arith.constant 1 : index
    %c0_89 = arith.constant 0 : index
    %c0_90 = arith.constant 0 : index
    %171 = vector.load %arg8[%c1_88, %c0_89, %c0_90] : memref<2x32x32xf32, #tpu.memory_space<vmem>>, vector<1x32x32xf32>
    %172 = vector.shape_cast %171 : vector<1x32x32xf32> to vector<32x32xf32>
    %cst_91 = arith.constant 0.000000e+00 : f32
    %173 = vector.broadcast %cst_91 : f32 to vector<6x32xf32>
    %c1_92 = arith.constant 1 : index
    %c0_93 = arith.constant 0 : index
    %c0_94 = arith.constant 0 : index
    %174 = vector.load %arg9[%c1_92, %c0_93, %c0_94] : memref<2x1x32xf32, #tpu.memory_space<vmem>>, vector<1x1x32xf32>
    %175 = vector.shape_cast %174 : vector<1x1x32xf32> to vector<1x32xf32>
    %176 = vector.broadcast %175 : vector<1x32xf32> to vector<6x32xf32>
    %177 = arith.addf %173, %176 : vector<6x32xf32>
    %178 = vector.extract_strided_slice %170 {offsets = [0, 0], sizes = [6, 16], strides = [1, 1]} : vector<6x96xf32> to vector<6x16xf32>
    %cst_95 = arith.constant 2.500000e-01 : f32
    %179 = vector.broadcast %cst_95 : f32 to vector<6x16xf32>
    %180 = arith.mulf %178, %179 : vector<6x16xf32>
    %181 = vector.extract_strided_slice %170 {offsets = [0, 32], sizes = [6, 16], strides = [1, 1]} : vector<6x96xf32> to vector<6x16xf32>
    %182 = vector.extract_strided_slice %170 {offsets = [0, 64], sizes = [6, 16], strides = [1, 1]} : vector<6x96xf32> to vector<6x16xf32>
    %183 = tpu.transpose %181, [1, 0] : vector<6x16xf32> -> vector<16x6xf32>
    %cst_96 = arith.constant dense<0.000000e+00> : vector<6x6xf32>
    %184 = tpu.matmul %180, %183, %cst_96 {dimension_numbers = #tpu.dot_dimension_numbers<[1], [0], [0], [1], [0, 0, 1, 1], [], []>} : vector<6x16xf32>, vector<16x6xf32>, vector<6x6xf32> -> vector<6x6xf32>
    %cst_97 = arith.constant dense<0xFF800000> : vector<6xf32>
    %185 = vector.multi_reduction <maximumf>, %184, %cst_97 [1] : vector<6x6xf32> to vector<6xf32>
    %186 = vector.shape_cast %185 : vector<6xf32> to vector<6x1xf32>
    %187 = vector.broadcast %186 : vector<6x1xf32> to vector<6x6xf32>
    %188 = arith.subf %184, %187 : vector<6x6xf32>
    %189 = math.exp %188 : vector<6x6xf32>
    %cst_98 = arith.constant dense<0.000000e+00> : vector<6xf32>
    %190 = vector.multi_reduction <add>, %189, %cst_98 [1] : vector<6x6xf32> to vector<6xf32>
    %191 = vector.shape_cast %190 : vector<6xf32> to vector<6x1xf32>
    %192 = tpu.reciprocal %191 {approx = true} : vector<6x1xf32> -> vector<6x1xf32>
    %193 = vector.broadcast %192 : vector<6x1xf32> to vector<6x6xf32>
    %194 = arith.mulf %189, %193 : vector<6x6xf32>
    %cst_99 = arith.constant dense<0.000000e+00> : vector<6x16xf32>
    %195 = tpu.matmul %194, %182, %cst_99 {dimension_numbers = #tpu.dot_dimension_numbers<[1], [0], [0], [1], [0, 0, 1, 1], [], []>} : vector<6x6xf32>, vector<6x16xf32>, vector<6x16xf32> -> vector<6x16xf32>
    %196 = vector.extract_strided_slice %172 {offsets = [0, 0], sizes = [16, 32], strides = [1, 1]} : vector<32x32xf32> to vector<16x32xf32>
    %cst_100 = arith.constant dense<0.000000e+00> : vector<6x32xf32>
    %197 = tpu.matmul %195, %196, %cst_100 {dimension_numbers = #tpu.dot_dimension_numbers<[1], [0], [0], [1], [0, 0, 1, 1], [], []>} : vector<6x16xf32>, vector<16x32xf32>, vector<6x32xf32> -> vector<6x32xf32>
    %198 = arith.addf %177, %197 : vector<6x32xf32>
    %199 = vector.extract_strided_slice %170 {offsets = [0, 16], sizes = [6, 16], strides = [1, 1]} : vector<6x96xf32> to vector<6x16xf32>
    %cst_101 = arith.constant 2.500000e-01 : f32
    %200 = vector.broadcast %cst_101 : f32 to vector<6x16xf32>
    %201 = arith.mulf %199, %200 : vector<6x16xf32>
    %202 = vector.extract_strided_slice %170 {offsets = [0, 48], sizes = [6, 16], strides = [1, 1]} : vector<6x96xf32> to vector<6x16xf32>
    %203 = vector.extract_strided_slice %170 {offsets = [0, 80], sizes = [6, 16], strides = [1, 1]} : vector<6x96xf32> to vector<6x16xf32>
    %204 = tpu.transpose %202, [1, 0] : vector<6x16xf32> -> vector<16x6xf32>
    %cst_102 = arith.constant dense<0.000000e+00> : vector<6x6xf32>
    %205 = tpu.matmul %201, %204, %cst_102 {dimension_numbers = #tpu.dot_dimension_numbers<[1], [0], [0], [1], [0, 0, 1, 1], [], []>} : vector<6x16xf32>, vector<16x6xf32>, vector<6x6xf32> -> vector<6x6xf32>
    %cst_103 = arith.constant dense<0xFF800000> : vector<6xf32>
    %206 = vector.multi_reduction <maximumf>, %205, %cst_103 [1] : vector<6x6xf32> to vector<6xf32>
    %207 = vector.shape_cast %206 : vector<6xf32> to vector<6x1xf32>
    %208 = vector.broadcast %207 : vector<6x1xf32> to vector<6x6xf32>
    %209 = arith.subf %205, %208 : vector<6x6xf32>
    %210 = math.exp %209 : vector<6x6xf32>
    %cst_104 = arith.constant dense<0.000000e+00> : vector<6xf32>
    %211 = vector.multi_reduction <add>, %210, %cst_104 [1] : vector<6x6xf32> to vector<6xf32>
    %212 = vector.shape_cast %211 : vector<6xf32> to vector<6x1xf32>
    %213 = tpu.reciprocal %212 {approx = true} : vector<6x1xf32> -> vector<6x1xf32>
    %214 = vector.broadcast %213 : vector<6x1xf32> to vector<6x6xf32>
    %215 = arith.mulf %210, %214 : vector<6x6xf32>
    %cst_105 = arith.constant dense<0.000000e+00> : vector<6x16xf32>
    %216 = tpu.matmul %215, %203, %cst_105 {dimension_numbers = #tpu.dot_dimension_numbers<[1], [0], [0], [1], [0, 0, 1, 1], [], []>} : vector<6x6xf32>, vector<6x16xf32>, vector<6x16xf32> -> vector<6x16xf32>
    %217 = vector.extract_strided_slice %172 {offsets = [16, 0], sizes = [16, 32], strides = [1, 1]} : vector<32x32xf32> to vector<16x32xf32>
    %cst_106 = arith.constant dense<0.000000e+00> : vector<6x32xf32>
    %218 = tpu.matmul %216, %217, %cst_106 {dimension_numbers = #tpu.dot_dimension_numbers<[1], [0], [0], [1], [0, 0, 1, 1], [], []>} : vector<6x16xf32>, vector<16x32xf32>, vector<6x32xf32> -> vector<6x32xf32>
    %219 = arith.addf %198, %218 : vector<6x32xf32>
    %220 = arith.addf %137, %219 : vector<6x32xf32>
    %c1_107 = arith.constant 1 : index
    %c0_108 = arith.constant 0 : index
    %c0_109 = arith.constant 0 : index
    %221 = vector.load %arg10[%c1_107, %c0_108, %c0_109] : memref<2x1x32xf32, #tpu.memory_space<vmem>>, vector<1x1x32xf32>
    %222 = vector.shape_cast %221 : vector<1x1x32xf32> to vector<1x32xf32>
    %c1_110 = arith.constant 1 : index
    %c0_111 = arith.constant 0 : index
    %c0_112 = arith.constant 0 : index
    %223 = vector.load %arg11[%c1_110, %c0_111, %c0_112] : memref<2x1x32xf32, #tpu.memory_space<vmem>>, vector<1x1x32xf32>
    %224 = vector.shape_cast %223 : vector<1x1x32xf32> to vector<1x32xf32>
    %cst_113 = arith.constant dense<0.000000e+00> : vector<6xf32>
    %225 = vector.multi_reduction <add>, %220, %cst_113 [1] : vector<6x32xf32> to vector<6xf32>
    %226 = vector.shape_cast %225 : vector<6xf32> to vector<6x1xf32>
    %cst_114 = arith.constant 3.200000e+01 : f32
    %227 = vector.broadcast %cst_114 : f32 to vector<6x1xf32>
    %228 = arith.divf %226, %227 : vector<6x1xf32>
    %229 = vector.broadcast %228 : vector<6x1xf32> to vector<6x32xf32>
    %230 = arith.subf %220, %229 : vector<6x32xf32>
    %231 = arith.mulf %230, %230 : vector<6x32xf32>
    %cst_115 = arith.constant dense<0.000000e+00> : vector<6xf32>
    %232 = vector.multi_reduction <add>, %231, %cst_115 [1] : vector<6x32xf32> to vector<6xf32>
    %233 = vector.shape_cast %232 : vector<6xf32> to vector<6x1xf32>
    %cst_116 = arith.constant 3.200000e+01 : f32
    %234 = vector.broadcast %cst_116 : f32 to vector<6x1xf32>
    %235 = arith.divf %233, %234 : vector<6x1xf32>
    %236 = vector.broadcast %228 : vector<6x1xf32> to vector<6x32xf32>
    %237 = arith.subf %220, %236 : vector<6x32xf32>
    %cst_117 = arith.constant 9.99999997E-7 : f32
    %238 = vector.broadcast %cst_117 : f32 to vector<6x1xf32>
    %239 = arith.addf %235, %238 : vector<6x1xf32>
    %240 = math.rsqrt %239 : vector<6x1xf32>
    %241 = vector.broadcast %240 : vector<6x1xf32> to vector<6x32xf32>
    %242 = arith.mulf %237, %241 : vector<6x32xf32>
    %243 = vector.broadcast %222 : vector<1x32xf32> to vector<6x32xf32>
    %244 = arith.mulf %242, %243 : vector<6x32xf32>
    %245 = vector.broadcast %224 : vector<1x32xf32> to vector<6x32xf32>
    %246 = arith.addf %244, %245 : vector<6x32xf32>
    %c1_118 = arith.constant 1 : index
    %c0_119 = arith.constant 0 : index
    %c0_120 = arith.constant 0 : index
    %247 = vector.load %arg12[%c1_118, %c0_119, %c0_120] : memref<2x32x64xf32, #tpu.memory_space<vmem>>, vector<1x32x64xf32>
    %248 = vector.shape_cast %247 : vector<1x32x64xf32> to vector<32x64xf32>
    %cst_121 = arith.constant dense<0.000000e+00> : vector<6x64xf32>
    %249 = tpu.matmul %246, %248, %cst_121 {dimension_numbers = #tpu.dot_dimension_numbers<[1], [0], [0], [1], [0, 0, 1, 1], [], []>} : vector<6x32xf32>, vector<32x64xf32>, vector<6x64xf32> -> vector<6x64xf32>
    %c1_122 = arith.constant 1 : index
    %c0_123 = arith.constant 0 : index
    %c0_124 = arith.constant 0 : index
    %250 = vector.load %arg13[%c1_122, %c0_123, %c0_124] : memref<2x1x64xf32, #tpu.memory_space<vmem>>, vector<1x1x64xf32>
    %251 = vector.shape_cast %250 : vector<1x1x64xf32> to vector<1x64xf32>
    %252 = vector.broadcast %251 : vector<1x64xf32> to vector<6x64xf32>
    %253 = arith.addf %249, %252 : vector<6x64xf32>
    %cst_125 = arith.constant 5.000000e-01 : f32
    %254 = vector.broadcast %cst_125 : f32 to vector<6x64xf32>
    %255 = arith.mulf %254, %253 : vector<6x64xf32>
    %cst_126 = arith.constant 0.707106769 : f32
    %256 = vector.broadcast %cst_126 : f32 to vector<6x64xf32>
    %257 = arith.mulf %253, %256 : vector<6x64xf32>
    %258 = math.erf %257 : vector<6x64xf32>
    %cst_127 = arith.constant 1.000000e+00 : f32
    %259 = vector.broadcast %cst_127 : f32 to vector<6x64xf32>
    %260 = arith.addf %259, %258 : vector<6x64xf32>
    %261 = arith.mulf %255, %260 : vector<6x64xf32>
    %c1_128 = arith.constant 1 : index
    %c0_129 = arith.constant 0 : index
    %c0_130 = arith.constant 0 : index
    %262 = vector.load %arg14[%c1_128, %c0_129, %c0_130] : memref<2x64x32xf32, #tpu.memory_space<vmem>>, vector<1x64x32xf32>
    %263 = vector.shape_cast %262 : vector<1x64x32xf32> to vector<64x32xf32>
    %cst_131 = arith.constant dense<0.000000e+00> : vector<6x32xf32>
    %264 = tpu.matmul %261, %263, %cst_131 {dimension_numbers = #tpu.dot_dimension_numbers<[1], [0], [0], [1], [0, 0, 1, 1], [], []>} : vector<6x64xf32>, vector<64x32xf32>, vector<6x32xf32> -> vector<6x32xf32>
    %265 = arith.addf %220, %264 : vector<6x32xf32>
    %c1_132 = arith.constant 1 : index
    %c0_133 = arith.constant 0 : index
    %c0_134 = arith.constant 0 : index
    %266 = vector.load %arg15[%c1_132, %c0_133, %c0_134] : memref<2x1x32xf32, #tpu.memory_space<vmem>>, vector<1x1x32xf32>
    %267 = vector.shape_cast %266 : vector<1x1x32xf32> to vector<1x32xf32>
    %268 = vector.broadcast %267 : vector<1x32xf32> to vector<6x32xf32>
    %269 = arith.addf %265, %268 : vector<6x32xf32>
    %c0_135 = arith.constant 0 : index
    %c0_136 = arith.constant 0 : index
    %270 = vector.load %arg16[%c0_135, %c0_136] : memref<1x32xf32, #tpu.memory_space<vmem>>, vector<1x32xf32>
    %c0_137 = arith.constant 0 : index
    %c0_138 = arith.constant 0 : index
    %271 = vector.load %arg17[%c0_137, %c0_138] : memref<1x32xf32, #tpu.memory_space<vmem>>, vector<1x32xf32>
    %cst_139 = arith.constant dense<0.000000e+00> : vector<6xf32>
    %272 = vector.multi_reduction <add>, %269, %cst_139 [1] : vector<6x32xf32> to vector<6xf32>
    %273 = vector.shape_cast %272 : vector<6xf32> to vector<6x1xf32>
    %cst_140 = arith.constant 3.200000e+01 : f32
    %274 = vector.broadcast %cst_140 : f32 to vector<6x1xf32>
    %275 = arith.divf %273, %274 : vector<6x1xf32>
    %276 = vector.broadcast %275 : vector<6x1xf32> to vector<6x32xf32>
    %277 = arith.subf %269, %276 : vector<6x32xf32>
    %278 = arith.mulf %277, %277 : vector<6x32xf32>
    %cst_141 = arith.constant dense<0.000000e+00> : vector<6xf32>
    %279 = vector.multi_reduction <add>, %278, %cst_141 [1] : vector<6x32xf32> to vector<6xf32>
    %280 = vector.shape_cast %279 : vector<6xf32> to vector<6x1xf32>
    %cst_142 = arith.constant 3.200000e+01 : f32
    %281 = vector.broadcast %cst_142 : f32 to vector<6x1xf32>
    %282 = arith.divf %280, %281 : vector<6x1xf32>
    %283 = vector.broadcast %275 : vector<6x1xf32> to vector<6x32xf32>
    %284 = arith.subf %269, %283 : vector<6x32xf32>
    %cst_143 = arith.constant 9.99999997E-7 : f32
    %285 = vector.broadcast %cst_143 : f32 to vector<6x1xf32>
    %286 = arith.addf %282, %285 : vector<6x1xf32>
    %287 = math.rsqrt %286 : vector<6x1xf32>
    %288 = vector.broadcast %287 : vector<6x1xf32> to vector<6x32xf32>
    %289 = arith.mulf %284, %288 : vector<6x32xf32>
    %290 = vector.broadcast %270 : vector<1x32xf32> to vector<6x32xf32>
    %291 = arith.mulf %289, %290 : vector<6x32xf32>
    %292 = vector.broadcast %271 : vector<1x32xf32> to vector<6x32xf32>
    %293 = arith.addf %291, %292 : vector<6x32xf32>
    %294 = vector.extract_strided_slice %293 {offsets = [0, 0], sizes = [1, 32], strides = [1, 1]} : vector<6x32xf32> to vector<1x32xf32>
    %c0_144 = arith.constant 0 : index
    %c0_145 = arith.constant 0 : index
    %295 = vector.load %arg18[%c0_144, %c0_145] : memref<32x10xf32, #tpu.memory_space<vmem>>, vector<32x10xf32>
    %cst_146 = arith.constant dense<0.000000e+00> : vector<1x10xf32>
    %296 = tpu.matmul %294, %295, %cst_146 {dimension_numbers = #tpu.dot_dimension_numbers<[1], [0], [0], [1], [0, 0, 1, 1], [], []>} : vector<1x32xf32>, vector<32x10xf32>, vector<1x10xf32> -> vector<1x10xf32>
    %297 = vector.extract_strided_slice %293 {offsets = [1, 0], sizes = [1, 32], strides = [1, 1]} : vector<6x32xf32> to vector<1x32xf32>
    %c0_147 = arith.constant 0 : index
    %c0_148 = arith.constant 0 : index
    %298 = vector.load %arg19[%c0_147, %c0_148] : memref<32x10xf32, #tpu.memory_space<vmem>>, vector<32x10xf32>
    %cst_149 = arith.constant dense<0.000000e+00> : vector<1x10xf32>
    %299 = tpu.matmul %297, %298, %cst_149 {dimension_numbers = #tpu.dot_dimension_numbers<[1], [0], [0], [1], [0, 0, 1, 1], [], []>} : vector<1x32xf32>, vector<32x10xf32>, vector<1x10xf32> -> vector<1x10xf32>
    %300 = arith.addf %296, %299 : vector<1x10xf32>
    %c0_150 = arith.constant 0 : index
    %c0_151 = arith.constant 0 : index
    %301 = vector.load %arg20[%c0_150, %c0_151] : memref<1x10xf32, #tpu.memory_space<vmem>>, vector<1x10xf32>
    %302 = arith.addf %300, %301 : vector<1x10xf32>
    %cst_152 = arith.constant 5.000000e-01 : f32
    %303 = vector.broadcast %cst_152 : f32 to vector<1x10xf32>
    %304 = arith.mulf %302, %303 : vector<1x10xf32>
    %c0_153 = arith.constant 0 : index
    %c0_154 = arith.constant 0 : index
    %c0_155 = arith.constant 0 : index
    %305 = vector.load %arg21[%c0_153, %c0_154, %c0_155] : memref<1x1x10xf32, #tpu.memory_space<vmem>>, vector<1x1x10xf32>
    %306 = vector.shape_cast %305 : vector<1x1x10xf32> to vector<1x10xf32>
    %307 = vector.shape_cast %304 : vector<1x10xf32> to vector<1x1x10xf32>
    tpu.vector_store %arg21[%c0_153, %c0_154, %c0_155], %307 {strides = array<i32>} : memref<1x1x10xf32, #tpu.memory_space<vmem>>, vector<1x1x10xf32>,
    return
  }
  func.func @transform_0(%arg0: i32) -> (i32, i32, i32) {
    %c0_i32 = arith.constant 0 : i32
    %c0_i32_0 = arith.constant 0 : i32
    %c0_i32_1 = arith.constant 0 : i32
    return %arg0, %c0_i32, %c0_i32_0 : i32, i32, i32
  }
  func.func @transform_1(%arg0: i32) -> (i32, i32) {
    %c0_i32 = arith.constant 0 : i32
    %c0_i32_0 = arith.constant 0 : i32
    %c0_i32_1 = arith.constant 0 : i32
    return %c0_i32, %c0_i32_0 : i32, i32
  }
  func.func @transform_2(%arg0: i32) -> (i32, i32) {
    %c0_i32 = arith.constant 0 : i32
    %c0_i32_0 = arith.constant 0 : i32
    %c0_i32_1 = arith.constant 0 : i32
    return %c0_i32, %c0_i32_0 : i32, i32
  }
  func.func @transform_3(%arg0: i32) -> (i32, i32, i32) {
    %c0_i32 = arith.constant 0 : i32
    %c0_i32_0 = arith.constant 0 : i32
    %c0_i32_1 = arith.constant 0 : i32
    %c0_i32_2 = arith.constant 0 : i32
    return %c0_i32, %c0_i32_0, %c0_i32_1 : i32, i32, i32
  }
  func.func @transform_4(%arg0: i32) -> (i32, i32, i32) {
    %c0_i32 = arith.constant 0 : i32
    %c0_i32_0 = arith.constant 0 : i32
    %c0_i32_1 = arith.constant 0 : i32
    %c0_i32_2 = arith.constant 0 : i32
    return %c0_i32, %c0_i32_0, %c0_i32_1 : i32, i32, i32
  }
  func.func @transform_5(%arg0: i32) -> (i32, i32, i32) {
    %c0_i32 = arith.constant 0 : i32
    %c0_i32_0 = arith.constant 0 : i32
    %c0_i32_1 = arith.constant 0 : i32
    %c0_i32_2 = arith.constant 0 : i32
    return %c0_i32, %c0_i32_0, %c0_i32_1 : i32, i32, i32
  }
  func.func @transform_6(%arg0: i32) -> (i32, i32, i32) {
    %c0_i32 = arith.constant 0 : i32
    %c0_i32_0 = arith.constant 0 : i32
    %c0_i32_1 = arith.constant 0 : i32
    %c0_i32_2 = arith.constant 0 : i32
    return %c0_i32, %c0_i32_0, %c0_i32_1 : i32, i32, i32
  }
  func.func @transform_7(%arg0: i32) -> (i32, i32, i32) {
    %c0_i32 = arith.constant 0 : i32
    %c0_i32_0 = arith.constant 0 : i32
    %c0_i32_1 = arith.constant 0 : i32
    %c0_i32_2 = arith.constant 0 : i32
    return %c0_i32, %c0_i32_0, %c0_i32_1 : i32, i32, i32
  }
  func.func @transform_8(%arg0: i32) -> (i32, i32, i32) {
    %c0_i32 = arith.constant 0 : i32
    %c0_i32_0 = arith.constant 0 : i32
    %c0_i32_1 = arith.constant 0 : i32
    %c0_i32_2 = arith.constant 0 : i32
    return %c0_i32, %c0_i32_0, %c0_i32_1 : i32, i32, i32
  }
  func.func @transform_9(%arg0: i32) -> (i32, i32, i32) {
    %c0_i32 = arith.constant 0 : i32
    %c0_i32_0 = arith.constant 0 : i32
    %c0_i32_1 = arith.constant 0 : i32
    %c0_i32_2 = arith.constant 0 : i32
    return %c0_i32, %c0_i32_0, %c0_i32_1 : i32, i32, i32
  }
  func.func @transform_10(%arg0: i32) -> (i32, i32, i32) {
    %c0_i32 = arith.constant 0 : i32
    %c0_i32_0 = arith.constant 0 : i32
    %c0_i32_1 = arith.constant 0 : i32
    %c0_i32_2 = arith.constant 0 : i32
    return %c0_i32, %c0_i32_0, %c0_i32_1 : i32, i32, i32
  }
  func.func @transform_11(%arg0: i32) -> (i32, i32, i32) {
    %c0_i32 = arith.constant 0 : i32
    %c0_i32_0 = arith.constant 0 : i32
    %c0_i32_1 = arith.constant 0 : i32
    %c0_i32_2 = arith.constant 0 : i32
    return %c0_i32, %c0_i32_0, %c0_i32_1 : i32, i32, i32
  }
  func.func @transform_12(%arg0: i32) -> (i32, i32, i32) {
    %c0_i32 = arith.constant 0 : i32
    %c0_i32_0 = arith.constant 0 : i32
    %c0_i32_1 = arith.constant 0 : i32
    %c0_i32_2 = arith.constant 0 : i32
    return %c0_i32, %c0_i32_0, %c0_i32_1 : i32, i32, i32
  }
  func.func @transform_13(%arg0: i32) -> (i32, i32, i32) {
    %c0_i32 = arith.constant 0 : i32
    %c0_i32_0 = arith.constant 0 : i32
    %c0_i32_1 = arith.constant 0 : i32
    %c0_i32_2 = arith.constant 0 : i32
    return %c0_i32, %c0_i32_0, %c0_i32_1 : i32, i32, i32
  }
  func.func @transform_14(%arg0: i32) -> (i32, i32, i32) {
    %c0_i32 = arith.constant 0 : i32
    %c0_i32_0 = arith.constant 0 : i32
    %c0_i32_1 = arith.constant 0 : i32
    %c0_i32_2 = arith.constant 0 : i32
    return %c0_i32, %c0_i32_0, %c0_i32_1 : i32, i32, i32
  }
  func.func @transform_15(%arg0: i32) -> (i32, i32) {
    %c0_i32 = arith.constant 0 : i32
    %c0_i32_0 = arith.constant 0 : i32
    %c0_i32_1 = arith.constant 0 : i32
    return %c0_i32, %c0_i32_0 : i32, i32
  }
  func.func @transform_16(%arg0: i32) -> (i32, i32) {
    %c0_i32 = arith.constant 0 : i32
    %c0_i32_0 = arith.constant 0 : i32
    %c0_i32_1 = arith.constant 0 : i32
    return %c0_i32, %c0_i32_0 : i32, i32
  }
  func.func @transform_17(%arg0: i32) -> (i32, i32) {
    %c0_i32 = arith.constant 0 : i32
    %c0_i32_0 = arith.constant 0 : i32
    %c0_i32_1 = arith.constant 0 : i32
    return %c0_i32, %c0_i32_0 : i32, i32
  }
  func.func @transform_18(%arg0: i32) -> (i32, i32) {
    %c0_i32 = arith.constant 0 : i32
    %c0_i32_0 = arith.constant 0 : i32
    %c0_i32_1 = arith.constant 0 : i32
    return %c0_i32, %c0_i32_0 : i32, i32
  }
  func.func @transform_19(%arg0: i32) -> (i32, i32) {
    %c0_i32 = arith.constant 0 : i32
    %c0_i32_0 = arith.constant 0 : i32
    %c0_i32_1 = arith.constant 0 : i32
    return %c0_i32, %c0_i32_0 : i32, i32
  }
  func.func @transform_20(%arg0: i32) -> (i32, i32, i32) {
    %c0_i32 = arith.constant 0 : i32
    %c0_i32_0 = arith.constant 0 : i32
    %c0_i32_1 = arith.constant 0 : i32
    return %arg0, %c0_i32, %c0_i32_0 : i32, i32, i32
  }
}

</mosaic_0001>

<llo_original>
// kernel: forward.1
$region0: #{forward.1}
  #allocation0 [shape = 'u32[]', space=smem, size = 0x4, offset = 0x4, fixed_abs, tag = 'smem constant byte address 0x4 - core index']
  #allocation1 [shape = 'u32[72,128]{1,0:T(1,128)}', space=vmem, size = 0x9000, scoped, tag = 'internal scratch']
  %s0 = inlined_call_operand.vmem [shape: f32[2,6,384], index: 0, kind: input, shape index: {}]
  %s1 = inlined_call_operand.vmem [shape: f32[384,32], index: 1, kind: input, shape index: {}]
  %s2 = inlined_call_operand.vmem [shape: f32[6,32], index: 2, kind: input, shape index: {}]
  %s3 = inlined_call_operand.vmem [shape: f32[2,1,32], index: 3, kind: input, shape index: {}]
  %s4 = inlined_call_operand.vmem [shape: f32[2,1,32], index: 4, kind: input, shape index: {}]
  %s5 = inlined_call_operand.vmem [shape: f32[2,32,96], index: 5, kind: input, shape index: {}]
  %s6 = inlined_call_operand.vmem [shape: f32[2,1,96], index: 6, kind: input, shape index: {}]
  %s7 = inlined_call_operand.vmem [shape: f32[2,32,32], index: 7, kind: input, shape index: {}]
  %s8 = inlined_call_operand.vmem [shape: f32[2,1,32], index: 8, kind: input, shape index: {}]
  %s9 = inlined_call_operand.vmem [shape: f32[2,1,32], index: 9, kind: input, shape index: {}]
  %s10 = inlined_call_operand.vmem [shape: f32[2,1,32], index: 10, kind: input, shape index: {}]
  %s11 = inlined_call_operand.vmem [shape: f32[2,32,64], index: 11, kind: input, shape index: {}]
  %s12 = inlined_call_operand.vmem [shape: f32[2,1,64], index: 12, kind: input, shape index: {}]
  %s13 = inlined_call_operand.vmem [shape: f32[2,64,32], index: 13, kind: input, shape index: {}]
  %s14 = inlined_call_operand.vmem [shape: f32[2,1,32], index: 14, kind: input, shape index: {}]
  %s15 = inlined_call_operand.vmem [shape: f32[1,32], index: 15, kind: input, shape index: {}]
  %s16 = inlined_call_operand.vmem [shape: f32[1,32], index: 16, kind: input, shape index: {}]
  %s17 = inlined_call_operand.vmem [shape: f32[32,10], index: 17, kind: input, shape index: {}]
  %s18 = inlined_call_operand.vmem [shape: f32[32,10], index: 18, kind: input, shape index: {}]
  %s19 = inlined_call_operand.vmem [shape: f32[1,10], index: 19, kind: input, shape index: {}]
  %s20 = inlined_call_operand.hbm [shape: f32[2,1,10], index: 20, kind: output, shape index: {}]
  %s21 = sld [smem:[#allocation0]]
  $region113: #{forward.1} parent=0
    _
  %s23 = ssub.s32 1, %s21
  %s24 = scalar_select 0, %s23, %s21
  $region1: #{forward.1} parent=0
    #allocation2 [shape = 'u8[1024]{0}', space=vmem, size = 0x400, scoped, tag = 'output window, operand 0']
    #allocation3 [shape = 's32[2]{0}', space=sflag, size = 0x8, scoped, tag = 'scoped memory for forward.1']
    %25 = vsyncpa [#allocation3], 0
    %s26 = scalar_lea.sflag [#allocation3], 1
    %27 = vsyncpa %s26, 0
    loop: start=0, step=1, limit=4
    $region2: #{forward.1} parent=1 // loop_pre_header
      _
    $region3: #{forward.1} parent=1 // loop_header
      %s29 = sphi 0, %s33
      %p30 = scmp.ge.s32.totalorder %s29, 4
      %s39 = sphi 0, %s41
      %s42 = sphi 0, %s39
      %s43 = sphi 0, %s42
      %s59 = sphi 0, %s43
      %s63 = sphi 0, %s63
      %s65 = sphi 0, %s63
      %s66 = sphi 0, %s65
      %s80 = sphi 0, %s66
      %s84 = sphi 0, %s84
      %s86 = sphi 0, %s84
      %s87 = sphi 0, %s86
      %s101 = sphi 0, %s87
      %s105 = sphi 0, %s105
      %s107 = sphi 0, %s105
      %s108 = sphi 0, %s107
      %s122 = sphi 0, %s108
      %s126 = sphi 0, %s126
      %s128 = sphi 0, %s126
      %s129 = sphi 0, %s128
      %s143 = sphi 0, %s129
      %s147 = sphi 0, %s147
      %s149 = sphi 0, %s147
      %s150 = sphi 0, %s149
      %s164 = sphi 0, %s150
      %s168 = sphi 0, %s168
      %s170 = sphi 0, %s168
      %s171 = sphi 0, %s170
      %s185 = sphi 0, %s171
      %s189 = sphi 0, %s189
      %s191 = sphi 0, %s189
      %s192 = sphi 0, %s191
      %s206 = sphi 0, %s192
      %s210 = sphi 0, %s210
      %s212 = sphi 0, %s210
      %s213 = sphi 0, %s212
      %s227 = sphi 0, %s213
      %s231 = sphi 0, %s231
      %s233 = sphi 0, %s231
      %s234 = sphi 0, %s233
      %s248 = sphi 0, %s234
      %s252 = sphi 0, %s252
      %s254 = sphi 0, %s252
      %s255 = sphi 0, %s254
      %s269 = sphi 0, %s255
      %s273 = sphi 0, %s273
      %s275 = sphi 0, %s273
      %s276 = sphi 0, %s275
      %s290 = sphi 0, %s276
      %s294 = sphi 0, %s294
      %s296 = sphi 0, %s294
      %s297 = sphi 0, %s296
      %s311 = sphi 0, %s297
      %s315 = sphi 0, %s315
      %s317 = sphi 0, %s315
      %s318 = sphi 0, %s317
      %s332 = sphi 0, %s318
      %s336 = sphi 0, %s336
      %s338 = sphi 0, %s336
      %s339 = sphi 0, %s338
      %s353 = sphi 0, %s339
      %s357 = sphi 0, %s357
      %s359 = sphi 0, %s357
      %s360 = sphi 0, %s359
      %s374 = sphi 0, %s360
      %s378 = sphi 0, %s378
      %s380 = sphi 0, %s378
      %s381 = sphi 0, %s380
      %s395 = sphi 0, %s381
      %s399 = sphi 0, %s399
      %s401 = sphi 0, %s399
      %s402 = sphi 0, %s401
      %s416 = sphi 0, %s402
      %s420 = sphi 0, %s420
      %s422 = sphi 0, %s420
      %s423 = sphi 0, %s422
      %s437 = sphi 0, %s423
      %s441 = sphi 0, %s441
      %s443 = sphi 0, %s441
      %s444 = sphi 0, %s443
      %s458 = sphi 0, %s444
      %s464 = sphi 0, %s466
      %s467 = sphi 0, %s464
      %s468 = sphi 0, %s467
      %s484 = sphi 0, %s468
    $region4: #{forward.1} parent=1 // loop_header_branch
      %32 = sbr.rel (%p30) target = $region8
    $region5: #{forward.1} parent=1 // loop_body
      %s34 = ssub.s32 %s29, 1
      %s35 = ssub.s32 %s29, 2
      %s36 = sadd.s32 %s29, 1
      %s37 = ssub.s32 %s29, %s36
      %p38 = scmp.eq.s32.totalorder %s37, 0
      %s40 = sadd.s32 %s39, 1
      %s41 = scalar_select %p38, %s39, %s40
      %p44 = pneg %p38
      %p45 = scmp.eq.s32.totalorder %s29, 1
      %p46 = por %p44, %p45
      %p47 = scmp.ne.s32.totalorder %s39, %s42
      %p48 = scmp.eq.s32.totalorder %s29, 0
      %p49 = por %p47, %p48
      %p50 = scmp.ne.s32.totalorder %s39, %s42
      %p51 = scmp.eq.s32.totalorder %s34, 1
      %p52 = por %p50, %p51
      %p53 = scmp.ne.s32.totalorder %s42, %s43
      %p54 = scmp.eq.s32.totalorder %s34, 0
      %p55 = por %p53, %p54
      %p56 = scmp.ne.s32.totalorder %s42, %s43
      %p57 = scmp.eq.s32.totalorder %s35, 1
      %p58 = por %p56, %p57
      %p60 = scmp.ne.s32.totalorder %s43, %s59
      %p61 = scmp.eq.s32.totalorder %s35, 0
      %p62 = por %p60, %p61
      %s64 = sadd.s32 %s63, 1
      %p67 = scmp.eq.s32.totalorder %s29, 1
      %p68 = scmp.ne.s32.totalorder %s63, %s65
      %p69 = scmp.eq.s32.totalorder %s29, 0
      %p70 = por %p68, %p69
      %p71 = scmp.ne.s32.totalorder %s63, %s65
      %p72 = scmp.eq.s32.totalorder %s34, 1
      %p73 = por %p71, %p72
      %p74 = scmp.ne.s32.totalorder %s65, %s66
      %p75 = scmp.eq.s32.totalorder %s34, 0
      %p76 = por %p74, %p75
      %p77 = scmp.ne.s32.totalorder %s65, %s66
      %p78 = scmp.eq.s32.totalorder %s35, 1
      %p79 = por %p77, %p78
      %p81 = scmp.ne.s32.totalorder %s66, %s80
      %p82 = scmp.eq.s32.totalorder %s35, 0
      %p83 = por %p81, %p82
      %s85 = sadd.s32 %s84, 1
      %p88 = scmp.eq.s32.totalorder %s29, 1
      %p89 = scmp.ne.s32.totalorder %s84, %s86
      %p90 = scmp.eq.s32.totalorder %s29, 0
      %p91 = por %p89, %p90
      %p92 = scmp.ne.s32.totalorder %s84, %s86
      %p93 = scmp.eq.s32.totalorder %s34, 1
      %p94 = por %p92, %p93
      %p95 = scmp.ne.s32.totalorder %s86, %s87
      %p96 = scmp.eq.s32.totalorder %s34, 0
      %p97 = por %p95, %p96
      %p98 = scmp.ne.s32.totalorder %s86, %s87
      %p99 = scmp.eq.s32.totalorder %s35, 1
      %p100 = por %p98, %p99
      %p102 = scmp.ne.s32.totalorder %s87, %s101
      %p103 = scmp.eq.s32.totalorder %s35, 0
      %p104 = por %p102, %p103
      %s106 = sadd.s32 %s105, 1
      %p109 = scmp.eq.s32.totalorder %s29, 1
      %p110 = scmp.ne.s32.totalorder %s105, %s107
      %p111 = scmp.eq.s32.totalorder %s29, 0
      %p112 = por %p110, %p111
      %p113 = scmp.ne.s32.totalorder %s105, %s107
      %p114 = scmp.eq.s32.totalorder %s34, 1
      %p115 = por %p113, %p114
      %p116 = scmp.ne.s32.totalorder %s107, %s108
      %p117 = scmp.eq.s32.totalorder %s34, 0
      %p118 = por %p116, %p117
      %p119 = scmp.ne.s32.totalorder %s107, %s108
      %p120 = scmp.eq.s32.totalorder %s35, 1
      %p121 = por %p119, %p120
      %p123 = scmp.ne.s32.totalorder %s108, %s122
      %p124 = scmp.eq.s32.totalorder %s35, 0
      %p125 = por %p123, %p124
      %s127 = sadd.s32 %s126, 1
      %p130 = scmp.eq.s32.totalorder %s29, 1
      %p131 = scmp.ne.s32.totalorder %s126, %s128
      %p132 = scmp.eq.s32.totalorder %s29, 0
      %p133 = por %p131, %p132
      %p134 = scmp.ne.s32.totalorder %s126, %s128
      %p135 = scmp.eq.s32.totalorder %s34, 1
      %p136 = por %p134, %p135
      %p137 = scmp.ne.s32.totalorder %s128, %s129
      %p138 = scmp.eq.s32.totalorder %s34, 0
      %p139 = por %p137, %p138
      %p140 = scmp.ne.s32.totalorder %s128, %s129
      %p141 = scmp.eq.s32.totalorder %s35, 1
      %p142 = por %p140, %p141
      %p144 = scmp.ne.s32.totalorder %s129, %s143
      %p145 = scmp.eq.s32.totalorder %s35, 0
      %p146 = por %p144, %p145
      %s148 = sadd.s32 %s147, 1
      %p151 = scmp.eq.s32.totalorder %s29, 1
      %p152 = scmp.ne.s32.totalorder %s147, %s149
      %p153 = scmp.eq.s32.totalorder %s29, 0
      %p154 = por %p152, %p153
      %p155 = scmp.ne.s32.totalorder %s147, %s149
      %p156 = scmp.eq.s32.totalorder %s34, 1
      %p157 = por %p155, %p156
      %p158 = scmp.ne.s32.totalorder %s149, %s150
      %p159 = scmp.eq.s32.totalorder %s34, 0
      %p160 = por %p158, %p159
      %p161 = scmp.ne.s32.totalorder %s149, %s150
      %p162 = scmp.eq.s32.totalorder %s35, 1
      %p163 = por %p161, %p162
      %p165 = scmp.ne.s32.totalorder %s150, %s164
      %p166 = scmp.eq.s32.totalorder %s35, 0
      %p167 = por %p165, %p166
      %s169 = sadd.s32 %s168, 1
      %p172 = scmp.eq.s32.totalorder %s29, 1
      %p173 = scmp.ne.s32.totalorder %s168, %s170
      %p174 = scmp.eq.s32.totalorder %s29, 0
      %p175 = por %p173, %p174
      %p176 = scmp.ne.s32.totalorder %s168, %s170
      %p177 = scmp.eq.s32.totalorder %s34, 1
      %p178 = por %p176, %p177
      %p179 = scmp.ne.s32.totalorder %s170, %s171
      %p180 = scmp.eq.s32.totalorder %s34, 0
      %p181 = por %p179, %p180
      %p182 = scmp.ne.s32.totalorder %s170, %s171
      %p183 = scmp.eq.s32.totalorder %s35, 1
      %p184 = por %p182, %p183
      %p186 = scmp.ne.s32.totalorder %s171, %s185
      %p187 = scmp.eq.s32.totalorder %s35, 0
      %p188 = por %p186, %p187
      %s190 = sadd.s32 %s189, 1
      %p193 = scmp.eq.s32.totalorder %s29, 1
      %p194 = scmp.ne.s32.totalorder %s189, %s191
      %p195 = scmp.eq.s32.totalorder %s29, 0
      %p196 = por %p194, %p195
      %p197 = scmp.ne.s32.totalorder %s189, %s191
      %p198 = scmp.eq.s32.totalorder %s34, 1
      %p199 = por %p197, %p198
      %p200 = scmp.ne.s32.totalorder %s191, %s192
      %p201 = scmp.eq.s32.totalorder %s34, 0
      %p202 = por %p200, %p201
      %p203 = scmp.ne.s32.totalorder %s191, %s192
      %p204 = scmp.eq.s32.totalorder %s35, 1
      %p205 = por %p203, %p204
      %p207 = scmp.ne.s32.totalorder %s192, %s206
      %p208 = scmp.eq.s32.totalorder %s35, 0
      %p209 = por %p207, %p208
      %s211 = sadd.s32 %s210, 1
      %p214 = scmp.eq.s32.totalorder %s29, 1
      %p215 = scmp.ne.s32.totalorder %s210, %s212
      %p216 = scmp.eq.s32.totalorder %s29, 0
      %p217 = por %p215, %p216
      %p218 = scmp.ne.s32.totalorder %s210, %s212
      %p219 = scmp.eq.s32.totalorder %s34, 1
      %p220 = por %p218, %p219
      %p221 = scmp.ne.s32.totalorder %s212, %s213
      %p222 = scmp.eq.s32.totalorder %s34, 0
      %p223 = por %p221, %p222
      %p224 = scmp.ne.s32.totalorder %s212, %s213
      %p225 = scmp.eq.s32.totalorder %s35, 1
      %p226 = por %p224, %p225
      %p228 = scmp.ne.s32.totalorder %s213, %s227
      %p229 = scmp.eq.s32.totalorder %s35, 0
      %p230 = por %p228, %p229
      %s232 = sadd.s32 %s231, 1
      %p235 = scmp.eq.s32.totalorder %s29, 1
      %p236 = scmp.ne.s32.totalorder %s231, %s233
      %p237 = scmp.eq.s32.totalorder %s29, 0
      %p238 = por %p236, %p237
      %p239 = scmp.ne.s32.totalorder %s231, %s233
      %p240 = scmp.eq.s32.totalorder %s34, 1
      %p241 = por %p239, %p240
      %p242 = scmp.ne.s32.totalorder %s233, %s234
      %p243 = scmp.eq.s32.totalorder %s34, 0
      %p244 = por %p242, %p243
      %p245 = scmp.ne.s32.totalorder %s233, %s234
      %p246 = scmp.eq.s32.totalorder %s35, 1
      %p247 = por %p245, %p246
      %p249 = scmp.ne.s32.totalorder %s234, %s248
      %p250 = scmp.eq.s32.totalorder %s35, 0
      %p251 = por %p249, %p250
      %s253 = sadd.s32 %s252, 1
      %p256 = scmp.eq.s32.totalorder %s29, 1
      %p257 = scmp.ne.s32.totalorder %s252, %s254
      %p258 = scmp.eq.s32.totalorder %s29, 0
      %p259 = por %p257, %p258
      %p260 = scmp.ne.s32.totalorder %s252, %s254
      %p261 = scmp.eq.s32.totalorder %s34, 1
      %p262 = por %p260, %p261
      %p263 = scmp.ne.s32.totalorder %s254, %s255
      %p264 = scmp.eq.s32.totalorder %s34, 0
      %p265 = por %p263, %p264
      %p266 = scmp.ne.s32.totalorder %s254, %s255
      %p267 = scmp.eq.s32.totalorder %s35, 1
      %p268 = por %p266, %p267
      %p270 = scmp.ne.s32.totalorder %s255, %s269
      %p271 = scmp.eq.s32.totalorder %s35, 0
      %p272 = por %p270, %p271
      %s274 = sadd.s32 %s273, 1
      %p277 = scmp.eq.s32.totalorder %s29, 1
      %p278 = scmp.ne.s32.totalorder %s273, %s275
      %p279 = scmp.eq.s32.totalorder %s29, 0
      %p280 = por %p278, %p279
      %p281 = scmp.ne.s32.totalorder %s273, %s275
      %p282 = scmp.eq.s32.totalorder %s34, 1
      %p283 = por %p281, %p282
      %p284 = scmp.ne.s32.totalorder %s275, %s276
      %p285 = scmp.eq.s32.totalorder %s34, 0
      %p286 = por %p284, %p285
      %p287 = scmp.ne.s32.totalorder %s275, %s276
      %p288 = scmp.eq.s32.totalorder %s35, 1
      %p289 = por %p287, %p288
      %p291 = scmp.ne.s32.totalorder %s276, %s290
      %p292 = scmp.eq.s32.totalorder %s35, 0
      %p293 = por %p291, %p292
      %s295 = sadd.s32 %s294, 1
      %p298 = scmp.eq.s32.totalorder %s29, 1
      %p299 = scmp.ne.s32.totalorder %s294, %s296
      %p300 = scmp.eq.s32.totalorder %s29, 0
      %p301 = por %p299, %p300
      %p302 = scmp.ne.s32.totalorder %s294, %s296
      %p303 = scmp.eq.s32.totalorder %s34, 1
      %p304 = por %p302, %p303
      %p305 = scmp.ne.s32.totalorder %s296, %s297
      %p306 = scmp.eq.s32.totalorder %s34, 0
      %p307 = por %p305, %p306
      %p308 = scmp.ne.s32.totalorder %s296, %s297
      %p309 = scmp.eq.s32.totalorder %s35, 1
      %p310 = por %p308, %p309
      %p312 = scmp.ne.s32.totalorder %s297, %s311
      %p313 = scmp.eq.s32.totalorder %s35, 0
      %p314 = por %p312, %p313
      %s316 = sadd.s32 %s315, 1
      %p319 = scmp.eq.s32.totalorder %s29, 1
      %p320 = scmp.ne.s32.totalorder %s315, %s317
      %p321 = scmp.eq.s32.totalorder %s29, 0
      %p322 = por %p320, %p321
      %p323 = scmp.ne.s32.totalorder %s315, %s317
      %p324 = scmp.eq.s32.totalorder %s34, 1
      %p325 = por %p323, %p324
      %p326 = scmp.ne.s32.totalorder %s317, %s318
      %p327 = scmp.eq.s32.totalorder %s34, 0
      %p328 = por %p326, %p327
      %p329 = scmp.ne.s32.totalorder %s317, %s318
      %p330 = scmp.eq.s32.totalorder %s35, 1
      %p331 = por %p329, %p330
      %p333 = scmp.ne.s32.totalorder %s318, %s332
      %p334 = scmp.eq.s32.totalorder %s35, 0
      %p335 = por %p333, %p334
      %s337 = sadd.s32 %s336, 1
      %p340 = scmp.eq.s32.totalorder %s29, 1
      %p341 = scmp.ne.s32.totalorder %s336, %s338
      %p342 = scmp.eq.s32.totalorder %s29, 0
      %p343 = por %p341, %p342
      %p344 = scmp.ne.s32.totalorder %s336, %s338
      %p345 = scmp.eq.s32.totalorder %s34, 1
      %p346 = por %p344, %p345
      %p347 = scmp.ne.s32.totalorder %s338, %s339
      %p348 = scmp.eq.s32.totalorder %s34, 0
      %p349 = por %p347, %p348
      %p350 = scmp.ne.s32.totalorder %s338, %s339
      %p351 = scmp.eq.s32.totalorder %s35, 1
      %p352 = por %p350, %p351
      %p354 = scmp.ne.s32.totalorder %s339, %s353
      %p355 = scmp.eq.s32.totalorder %s35, 0
      %p356 = por %p354, %p355
      %s358 = sadd.s32 %s357, 1
      %p361 = scmp.eq.s32.totalorder %s29, 1
      %p362 = scmp.ne.s32.totalorder %s357, %s359
      %p363 = scmp.eq.s32.totalorder %s29, 0
      %p364 = por %p362, %p363
      %p365 = scmp.ne.s32.totalorder %s357, %s359
      %p366 = scmp.eq.s32.totalorder %s34, 1
      %p367 = por %p365, %p366
      %p368 = scmp.ne.s32.totalorder %s359, %s360
      %p369 = scmp.eq.s32.totalorder %s34, 0
      %p370 = por %p368, %p369
      %p371 = scmp.ne.s32.totalorder %s359, %s360
      %p372 = scmp.eq.s32.totalorder %s35, 1
      %p373 = por %p371, %p372
      %p375 = scmp.ne.s32.totalorder %s360, %s374
      %p376 = scmp.eq.s32.totalorder %s35, 0
      %p377 = por %p375, %p376
      %s379 = sadd.s32 %s378, 1
      %p382 = scmp.eq.s32.totalorder %s29, 1
      %p383 = scmp.ne.s32.totalorder %s378, %s380
      %p384 = scmp.eq.s32.totalorder %s29, 0
      %p385 = por %p383, %p384
      %p386 = scmp.ne.s32.totalorder %s378, %s380
      %p387 = scmp.eq.s32.totalorder %s34, 1
      %p388 = por %p386, %p387
      %p389 = scmp.ne.s32.totalorder %s380, %s381
      %p390 = scmp.eq.s32.totalorder %s34, 0
      %p391 = por %p389, %p390
      %p392 = scmp.ne.s32.totalorder %s380, %s381
      %p393 = scmp.eq.s32.totalorder %s35, 1
      %p394 = por %p392, %p393
      %p396 = scmp.ne.s32.totalorder %s381, %s395
      %p397 = scmp.eq.s32.totalorder %s35, 0
      %p398 = por %p396, %p397
      %s400 = sadd.s32 %s399, 1
      %p403 = scmp.eq.s32.totalorder %s29, 1
      %p404 = scmp.ne.s32.totalorder %s399, %s401
      %p405 = scmp.eq.s32.totalorder %s29, 0
      %p406 = por %p404, %p405
      %p407 = scmp.ne.s32.totalorder %s399, %s401
      %p408 = scmp.eq.s32.totalorder %s34, 1
      %p409 = por %p407, %p408
      %p410 = scmp.ne.s32.totalorder %s401, %s402
      %p411 = scmp.eq.s32.totalorder %s34, 0
      %p412 = por %p410, %p411
      %p413 = scmp.ne.s32.totalorder %s401, %s402
      %p414 = scmp.eq.s32.totalorder %s35, 1
      %p415 = por %p413, %p414
      %p417 = scmp.ne.s32.totalorder %s402, %s416
      %p418 = scmp.eq.s32.totalorder %s35, 0
      %p419 = por %p417, %p418
      %s421 = sadd.s32 %s420, 1
      %p424 = scmp.eq.s32.totalorder %s29, 1
      %p425 = scmp.ne.s32.totalorder %s420, %s422
      %p426 = scmp.eq.s32.totalorder %s29, 0
      %p427 = por %p425, %p426
      %p428 = scmp.ne.s32.totalorder %s420, %s422
      %p429 = scmp.eq.s32.totalorder %s34, 1
      %p430 = por %p428, %p429
      %p431 = scmp.ne.s32.totalorder %s422, %s423
      %p432 = scmp.eq.s32.totalorder %s34, 0
      %p433 = por %p431, %p432
      %p434 = scmp.ne.s32.totalorder %s422, %s423
      %p435 = scmp.eq.s32.totalorder %s35, 1
      %p436 = por %p434, %p435
      %p438 = scmp.ne.s32.totalorder %s423, %s437
      %p439 = scmp.eq.s32.totalorder %s35, 0
      %p440 = por %p438, %p439
      %s442 = sadd.s32 %s441, 1
      %p445 = scmp.eq.s32.totalorder %s29, 1
      %p446 = scmp.ne.s32.totalorder %s441, %s443
      %p447 = scmp.eq.s32.totalorder %s29, 0
      %p448 = por %p446, %p447
      %p449 = scmp.ne.s32.totalorder %s441, %s443
      %p450 = scmp.eq.s32.totalorder %s34, 1
      %p451 = por %p449, %p450
      %p452 = scmp.ne.s32.totalorder %s443, %s444
      %p453 = scmp.eq.s32.totalorder %s34, 0
      %p454 = por %p452, %p453
      %p455 = scmp.ne.s32.totalorder %s443, %s444
      %p456 = scmp.eq.s32.totalorder %s35, 1
      %p457 = por %p455, %p456
      %p459 = scmp.ne.s32.totalorder %s444, %s458
      %p460 = scmp.eq.s32.totalorder %s35, 0
      %p461 = por %p459, %p460
      %s462 = ssub.s32 %s29, %s36
      %p463 = scmp.eq.s32.totalorder %s462, 0
      %s465 = sadd.s32 %s464, 1
      %s466 = scalar_select %p463, %s464, %s465
      %p469 = pneg %p463
      %p470 = scmp.eq.s32.totalorder %s29, 1
      %p471 = por %p469, %p470
      %p472 = scmp.ne.s32.totalorder %s464, %s467
      %p473 = scmp.eq.s32.totalorder %s29, 0
      %p474 = por %p472, %p473
      %p475 = scmp.ne.s32.totalorder %s464, %s467
      %p476 = scmp.eq.s32.totalorder %s34, 1
      %p477 = por %p475, %p476
      %p478 = scmp.ne.s32.totalorder %s467, %s468
      %p479 = scmp.eq.s32.totalorder %s34, 0
      %p480 = por %p478, %p479
      %p481 = scmp.ne.s32.totalorder %s467, %s468
      %p482 = scmp.eq.s32.totalorder %s35, 1
      %p483 = por %p481, %p482
      %p485 = scmp.ne.s32.totalorder %s468, %s484
      %p486 = scmp.eq.s32.totalorder %s35, 0
      %p487 = por %p485, %p486
      %p488 = scmp.le.s32.totalorder 1, %s29
      %p489 = scmp.lt.s32.totalorder %s29, 3
      %p490 = pnand %p488, %p489
      %p491 = pneg %p490
      // Predicated region
      $region9: #{forward.1} parent=5 // pred_check
        _
      $region10: #{forward.1} parent=5 // pred_check_branch
        %493 = sbr.rel (%p490) target = $region12
      $region11: #{forward.1} parent=5 // pred_region
        %s494 = ssub.s32 %s29, 1
        // Predicated region
        $region13: #{forward.1} parent=11 // pred_check
          %p495 = pneg %p76
        $region14: #{forward.1} parent=11 // pred_check_branch
          %497 = sbr.rel (%p495) target = $region16
        $region15: #{forward.1} parent=11 // pred_region
          _
        $region16: #{forward.1} parent=11 // pred_fallthru
          _
        // Predicated region
        $region17: #{forward.1} parent=11 // pred_check
          %p498 = pneg %p97
        $region18: #{forward.1} parent=11 // pred_check_branch
          %500 = sbr.rel (%p498) target = $region20
        $region19: #{forward.1} parent=11 // pred_region
          _
        $region20: #{forward.1} parent=11 // pred_fallthru
          _
        // Predicated region
        $region21: #{forward.1} parent=11 // pred_check
          %p501 = pneg %p118
        $region22: #{forward.1} parent=11 // pred_check_branch
          %503 = sbr.rel (%p501) target = $region24
        $region23: #{forward.1} parent=11 // pred_region
          _
        $region24: #{forward.1} parent=11 // pred_fallthru
          _
        // Predicated region
        $region25: #{forward.1} parent=11 // pred_check
          %p504 = pneg %p139
        $region26: #{forward.1} parent=11 // pred_check_branch
          %506 = sbr.rel (%p504) target = $region28
        $region27: #{forward.1} parent=11 // pred_region
          _
        $region28: #{forward.1} parent=11 // pred_fallthru
          _
        // Predicated region
        $region29: #{forward.1} parent=11 // pred_check
          %p507 = pneg %p160
        $region30: #{forward.1} parent=11 // pred_check_branch
          %509 = sbr.rel (%p507) target = $region32
        $region31: #{forward.1} parent=11 // pred_region
          _
        $region32: #{forward.1} parent=11 // pred_fallthru
          _
        // Predicated region
        $region33: #{forward.1} parent=11 // pred_check
          %p510 = pneg %p181
        $region34: #{forward.1} parent=11 // pred_check_branch
          %512 = sbr.rel (%p510) target = $region36
        $region35: #{forward.1} parent=11 // pred_region
          _
        $region36: #{forward.1} parent=11 // pred_fallthru
          _
        // Predicated region
        $region37: #{forward.1} parent=11 // pred_check
          %p513 = pneg %p202
        $region38: #{forward.1} parent=11 // pred_check_branch
          %515 = sbr.rel (%p513) target = $region40
        $region39: #{forward.1} parent=11 // pred_region
          _
        $region40: #{forward.1} parent=11 // pred_fallthru
          _
        // Predicated region
        $region41: #{forward.1} parent=11 // pred_check
          %p516 = pneg %p223
        $region42: #{forward.1} parent=11 // pred_check_branch
          %518 = sbr.rel (%p516) target = $region44
        $region43: #{forward.1} parent=11 // pred_region
          _
        $region44: #{forward.1} parent=11 // pred_fallthru
          _
        // Predicated region
        $region45: #{forward.1} parent=11 // pred_check
          %p519 = pneg %p244
        $region46: #{forward.1} parent=11 // pred_check_branch
          %521 = sbr.rel (%p519) target = $region48
        $region47: #{forward.1} parent=11 // pred_region
          _
        $region48: #{forward.1} parent=11 // pred_fallthru
          _
        // Predicated region
        $region49: #{forward.1} parent=11 // pred_check
          %p522 = pneg %p265
        $region50: #{forward.1} parent=11 // pred_check_branch
          %524 = sbr.rel (%p522) target = $region52
        $region51: #{forward.1} parent=11 // pred_region
          _
        $region52: #{forward.1} parent=11 // pred_fallthru
          _
        // Predicated region
        $region53: #{forward.1} parent=11 // pred_check
          %p525 = pneg %p286
        $region54: #{forward.1} parent=11 // pred_check_branch
          %527 = sbr.rel (%p525) target = $region56
        $region55: #{forward.1} parent=11 // pred_region
          _
        $region56: #{forward.1} parent=11 // pred_fallthru
          _
        // Predicated region
        $region57: #{forward.1} parent=11 // pred_check
          %p528 = pneg %p307
        $region58: #{forward.1} parent=11 // pred_check_branch
          %530 = sbr.rel (%p528) target = $region60
        $region59: #{forward.1} parent=11 // pred_region
          _
        $region60: #{forward.1} parent=11 // pred_fallthru
          _
        // Predicated region
        $region61: #{forward.1} parent=11 // pred_check
          %p531 = pneg %p328
        $region62: #{forward.1} parent=11 // pred_check_branch
          %533 = sbr.rel (%p531) target = $region64
        $region63: #{forward.1} parent=11 // pred_region
          _
        $region64: #{forward.1} parent=11 // pred_fallthru
          _
        // Predicated region
        $region65: #{forward.1} parent=11 // pred_check
          %p534 = pneg %p349
        $region66: #{forward.1} parent=11 // pred_check_branch
          %536 = sbr.rel (%p534) target = $region68
        $region67: #{forward.1} parent=11 // pred_region
          _
        $region68: #{forward.1} parent=11 // pred_fallthru
          _
        // Predicated region
        $region69: #{forward.1} parent=11 // pred_check
          %p537 = pneg %p370
        $region70: #{forward.1} parent=11 // pred_check_branch
          %539 = sbr.rel (%p537) target = $region72
        $region71: #{forward.1} parent=11 // pred_region
          _
        $region72: #{forward.1} parent=11 // pred_fallthru
          _
        // Predicated region
        $region73: #{forward.1} parent=11 // pred_check
          %p540 = pneg %p391
        $region74: #{forward.1} parent=11 // pred_check_branch
          %542 = sbr.rel (%p540) target = $region76
        $region75: #{forward.1} parent=11 // pred_region
          _
        $region76: #{forward.1} parent=11 // pred_fallthru
          _
        // Predicated region
        $region77: #{forward.1} parent=11 // pred_check
          %p543 = pneg %p412
        $region78: #{forward.1} parent=11 // pred_check_branch
          %545 = sbr.rel (%p543) target = $region80
        $region79: #{forward.1} parent=11 // pred_region
          _
        $region80: #{forward.1} parent=11 // pred_fallthru
          _
        // Predicated region
        $region81: #{forward.1} parent=11 // pred_check
          %p546 = pneg %p433
        $region82: #{forward.1} parent=11 // pred_check_branch
          %548 = sbr.rel (%p546) target = $region84
        $region83: #{forward.1} parent=11 // pred_region
          _
        $region84: #{forward.1} parent=11 // pred_fallthru
          _
        // Predicated region
        $region85: #{forward.1} parent=11 // pred_check
          %p549 = pneg %p454
        $region86: #{forward.1} parent=11 // pred_check_branch
          %551 = sbr.rel (%p549) target = $region88
        $region87: #{forward.1} parent=11 // pred_region
          _
        $region88: #{forward.1} parent=11 // pred_fallthru
          _
      $region12: #{forward.1} parent=5 // pred_fallthru
        _
      %p552 = scmp.lt.s32.totalorder %s29, 2
      // Predicated region
      $region89: #{forward.1} parent=5 // pred_check
        %p553 = pneg %p552
      $region90: #{forward.1} parent=5 // pred_check_branch
        %555 = sbr.rel (%p553) target = $region92
      $region91: #{forward.1} parent=5 // pred_region
        // Predicated region
        $region93: #{forward.1} parent=91 // pred_check
          %p556 = pneg %p49
        $region94: #{forward.1} parent=91 // pred_check_branch
          %558 = sbr.rel (%p556) target = $region96
        $region95: #{forward.1} parent=91 // pred_region
          %p559 = scmp.lt.s32.totalorder %s29, 1
          %s560 = scalar_select %p559, %s29, 1
          %s561 = smul.addr %s560, 3
          %s562 = smul.addr %s561, 8
          %s563 = scalar_lea.vmem %s0, %s562
        $region96: #{forward.1} parent=91 // pred_fallthru
          _
      $region92: #{forward.1} parent=5 // pred_fallthru
        _
      %p564 = scmp.le.s32.totalorder 1, %s29
      %p565 = scmp.lt.s32.totalorder %s29, 3
      %p566 = pnand %p564, %p565
      %p567 = pneg %p566
      // Predicated region
      $region97: #{forward.1} parent=5 // pred_check
        _
      $region98: #{forward.1} parent=5 // pred_check_branch
        %569 = sbr.rel (%p566) target = $region100
      $region99: #{forward.1} parent=5 // pred_region
        %s570 = ssub.s32 %s29, 1
        %p571 = scmp.lt.s32.totalorder %s34, 1
        %s572 = scalar_select %p571, %s34, 1
        %s573 = smul.addr %s572, 3
        %s574 = smul.addr %s573, 8
        %s575 = scalar_lea.vmem %s0, %s574
        %p576 = pneg %p55
        %p577 = pneg %p52
        %p578 = pneg %p76
        %p579 = pneg %p73
        %p580 = pneg %p97
        %p581 = pneg %p94
        %p582 = pneg %p118
        %p583 = pneg %p115
        %p584 = pneg %p139
        %p585 = pneg %p136
        %p586 = pneg %p160
        %p587 = pneg %p157
        %p588 = pneg %p181
        %p589 = pneg %p178
        %p590 = pneg %p202
        %p591 = pneg %p199
        %p592 = pneg %p223
        %p593 = pneg %p220
        %p594 = pneg %p244
        %p595 = pneg %p241
        %p596 = pneg %p265
        %p597 = pneg %p262
        %p598 = pneg %p286
        %p599 = pneg %p283
        %p600 = pneg %p307
        %p601 = pneg %p304
        %p602 = pneg %p328
        %p603 = pneg %p325
        %p604 = pneg %p349
        %p605 = pneg %p346
        %p606 = pneg %p370
        %p607 = pneg %p367
        %p608 = pneg %p391
        %p609 = pneg %p388
        %p610 = pneg %p412
        %p611 = pneg %p409
        %p612 = pneg %p433
        %p613 = pneg %p430
        %p614 = pneg %p454
        %p615 = pneg %p451
        %p616 = pneg %p480
        %p617 = pneg %p477
        %s618 = sand.u32 %s467, 1
        %s619 = scalar_lea.sflag [#allocation3], %s618
        %s620 = sand.u32 %s467, 1
        %s621 = scalar_lea.vmem [#allocation2], %s620
        %p622 = scmp.lt.s32.totalorder %s34, 1
        %s623 = scalar_select %p622, %s34, 1
        %s624 = smul.addr %s623, 3
        %s625 = smul.addr %s624, 8
        %s626 = scalar_lea.vmem %s0, %s625
        %v627 = vld [vmem:[%s626] sm:$0x3f]
        %v628 = vld [vmem:[%s626 + $0x8] sm:$0x3f]
        %v629 = vld [vmem:[%s626 + $0x10] sm:$0x3f]
        %v630 = vld [vmem:[%s1] sm:$0xff]
        %v631 = vld [vmem:[%s1 + $0x8] sm:$0xff]
        %v632 = vld [vmem:[%s1 + $0x10] sm:$0xff]
        %v633 = vld [vmem:[%s1 + $0x18] sm:$0xff]
        %v634 = vld [vmem:[%s1 + $0x20] sm:$0xff]
        %v635 = vld [vmem:[%s1 + $0x28] sm:$0xff]
        %v636 = vld [vmem:[%s1 + $0x30] sm:$0xff]
        %v637 = vld [vmem:[%s1 + $0x38] sm:$0xff]
        %v638 = vld [vmem:[%s1 + $0x40] sm:$0xff]
        %v639 = vld [vmem:[%s1 + $0x48] sm:$0xff]
        %v640 = vld [vmem:[%s1 + $0x50] sm:$0xff]
        %v641 = vld [vmem:[%s1 + $0x58] sm:$0xff]
        %v642 = vld [vmem:[%s1 + $0x60] sm:$0xff]
        %v643 = vld [vmem:[%s1 + $0x68] sm:$0xff]
        %v644 = vld [vmem:[%s1 + $0x70] sm:$0xff]
        %v645 = vld [vmem:[%s1 + $0x78] sm:$0xff]
        %v646 = vld [vmem:[%s1 + $0x80] sm:$0xff]
        %v647 = vld [vmem:[%s1 + $0x88] sm:$0xff]
        %v648 = vld [vmem:[%s1 + $0x90] sm:$0xff]
        %v649 = vld [vmem:[%s1 + $0x98] sm:$0xff]
        %v650 = vld [vmem:[%s1 + $0xa0] sm:$0xff]
        %v651 = vld [vmem:[%s1 + $0xa8] sm:$0xff]
        %v652 = vld [vmem:[%s1 + $0xb0] sm:$0xff]
        %v653 = vld [vmem:[%s1 + $0xb8] sm:$0xff]
        %v654 = vld [vmem:[%s1 + $0xc0] sm:$0xff]
        %v655 = vld [vmem:[%s1 + $0xc8] sm:$0xff]
        %v656 = vld [vmem:[%s1 + $0xd0] sm:$0xff]
        %v657 = vld [vmem:[%s1 + $0xd8] sm:$0xff]
        %v658 = vld [vmem:[%s1 + $0xe0] sm:$0xff]
        %v659 = vld [vmem:[%s1 + $0xe8] sm:$0xff]
        %v660 = vld [vmem:[%s1 + $0xf0] sm:$0xff]
        %v661 = vld [vmem:[%s1 + $0xf8] sm:$0xff]
        %v662 = vld [vmem:[%s1 + $0x100] sm:$0xff]
        %v663 = vld [vmem:[%s1 + $0x108] sm:$0xff]
        %v664 = vld [vmem:[%s1 + $0x110] sm:$0xff]
        %v665 = vld [vmem:[%s1 + $0x118] sm:$0xff]
        %v666 = vld [vmem:[%s1 + $0x120] sm:$0xff]
        %v667 = vld [vmem:[%s1 + $0x128] sm:$0xff]
        %v668 = vld [vmem:[%s1 + $0x130] sm:$0xff]
        %v669 = vld [vmem:[%s1 + $0x138] sm:$0xff]
        %v670 = vld [vmem:[%s1 + $0x140] sm:$0xff]
        %v671 = vld [vmem:[%s1 + $0x148] sm:$0xff]
        %v672 = vld [vmem:[%s1 + $0x150] sm:$0xff]
        %v673 = vld [vmem:[%s1 + $0x158] sm:$0xff]
        %v674 = vld [vmem:[%s1 + $0x160] sm:$0xff]
        %v675 = vld [vmem:[%s1 + $0x168] sm:$0xff]
        %v676 = vld [vmem:[%s1 + $0x170] sm:$0xff]
        %v677 = vld [vmem:[%s1 + $0x178] sm:$0xff]
        %v678 = vld [vmem:[%s2] sm:$0x3f]
        %679 = vmatpush.msra.mxu0 %v645
        %680 = vmatpush.msra.mxu0 %v644
        %681 = vmatpush.msra.mxu0 %v643
        %682 = vmatpush.msra.mxu0 %v642
        %683 = vmatpush.msra.mxu0 %v641
        %684 = vmatpush.msra.mxu0 %v640
        %685 = vmatpush.msra.mxu0 %v639
        %686 = vmatpush.msra.mxu0 %v638
        %687 = vmatpush.msra.mxu0 %v637
        %688 = vmatpush.msra.mxu0 %v636
        %689 = vmatpush.msra.mxu0 %v635
        %690 = vmatpush.msra.mxu0 %v634
        %691 = vmatpush.msra.mxu0 %v633
        %692 = vmatpush.msra.mxu0 %v632
        %693 = vmatpush.msra.mxu0 %v631
        %694 = vmatpush.msra.mxu0 %v630
        %695 = vmatmul.f32.gmra.mxu0 %v627
        %v696 = vpop.f32.mrf.mxu0
        %v697 = vadd.f32 %v678, %v696
        %698 = vdwg.mxu0
        %699 = vmatpush.msra.mxu0 %v661
        %700 = vmatpush.msra.mxu0 %v660
        %701 = vmatpush.msra.mxu0 %v659
        %702 = vmatpush.msra.mxu0 %v658
        %703 = vmatpush.msra.mxu0 %v657
        %704 = vmatpush.msra.mxu0 %v656
        %705 = vmatpush.msra.mxu0 %v655
        %706 = vmatpush.msra.mxu0 %v654
        %707 = vmatpush.msra.mxu0 %v653
        %708 = vmatpush.msra.mxu0 %v652
        %709 = vmatpush.msra.mxu0 %v651
        %710 = vmatpush.msra.mxu0 %v650
        %711 = vmatpush.msra.mxu0 %v649
        %712 = vmatpush.msra.mxu0 %v648
        %713 = vmatpush.msra.mxu0 %v647
        %714 = vmatpush.msra.mxu0 %v646
        %715 = vmatmul.f32.gmra.mxu0 %v628
        %v716 = vpop.f32.mrf.mxu0
        %v717 = vadd.f32 %v697, %v716
        %718 = vdwg.mxu0
        %719 = vmatpush.msra.mxu0 %v677
        %720 = vmatpush.msra.mxu0 %v676
        %721 = vmatpush.msra.mxu0 %v675
        %722 = vmatpush.msra.mxu0 %v674
        %723 = vmatpush.msra.mxu0 %v673
        %724 = vmatpush.msra.mxu0 %v672
        %725 = vmatpush.msra.mxu0 %v671
        %726 = vmatpush.msra.mxu0 %v670
        %727 = vmatpush.msra.mxu0 %v669
        %728 = vmatpush.msra.mxu0 %v668
        %729 = vmatpush.msra.mxu0 %v667
        %730 = vmatpush.msra.mxu0 %v666
        %731 = vmatpush.msra.mxu0 %v665
        %732 = vmatpush.msra.mxu0 %v664
        %733 = vmatpush.msra.mxu0 %v663
        %734 = vmatpush.msra.mxu0 %v662
        %735 = vmatmul.f32.gmra.mxu0 %v629
        %v736 = vpop.f32.mrf.mxu0
        %v737 = vadd.f32 %v717, %v736
        %738 = vdwg.mxu0
        %v739 = vld [vmem:[%s3] sm:$0x1]
        %v740 = vld [vmem:[%s4] sm:$0x1]
        %vm741 = vcmask 259072
        %v742 = vsel %vm741, %v737, 0.0
        %743 = vadd.xlane.f32.xlu0 %v742
        %v744 = vpop.xlane.xlu0 %743
        %v745 = vrcp.pop 32.0
        %v746 = vmul.f32 32.0, %v745
        %v747 = vsub.f32 1.0, %v746
        %v748 = vmul.f32 %v745, %v747
        %v749 = vadd.f32 %v745, %v748
        %vm750 = vweird.f32 %v745
        %v751 = vsel %vm750, %v745, %v749
        %v752 = vmul.f32 %v744, %v751
        %v753 = vsub.f32 %v737, %v752
        %v754 = vmul.f32 %v753, %v753
        %v755 = vsel %vm741, %v754, 0.0
        %756 = vadd.xlane.f32.xlu0 %v755
        %v757 = vpop.xlane.xlu0 %756
        %v758 = vmul.f32 %v757, %v751
        %v759 = vadd.f32 %v758, 1e-06
        %v760 = vrsqrt.pop %v759
        %v761 = vmul.f32 %v760, %v759
        %v762 = vmul.f32 %v761, %v760
        %v763 = vmul.f32 0.5, %v762
        %v764 = vsub.f32 1.5, %v763
        %v765 = vmul.f32 %v760, %v764
        %vm766 = vweird.f32 %v759
        %vm767 = vweird.f32 %v760
        %vm768 = vmor %vm766, %vm767
        %v769 = vsel %vm768, %v760, %v765
        %v770 = vmul.f32 %v753, %v769
        %v772 = vperm.slane %v739, 0
        %v774 = vmul.f32 %v770, %v772
        %v776 = vperm.slane %v740, 0
        %v778 = vadd.f32 %v774, %v776
        %v779 = vld [vmem:[%s5] sm:$0xff]
        %v780 = vld [vmem:[%s5 + $0x8] sm:$0xff]
        %v781 = vld [vmem:[%s5 + $0x10] sm:$0xff]
        %v782 = vld [vmem:[%s5 + $0x18] sm:$0xff]
        %v783 = vld [vmem:[%s6] sm:$0x1]
        %v785 = vperm.slane %v783, 0
        %vm787 = vcmask 261120
        %v789 = vsel %vm787, %v778, 0
        %791 = vmatpush.msra.mxu0 0.0
        %792 = vmatpush.msra.mxu0 0.0
        %793 = vmatpush.msra.mxu0 0.0
        %794 = vmatpush.msra.mxu0 0.0
        %795 = vmatpush.msra.mxu0 0.0
        %796 = vmatpush.msra.mxu0 0.0
        %797 = vmatpush.msra.mxu0 0.0
        %798 = vmatpush.msra.mxu0 0.0
        %799 = vmatpush.msra.mxu0 0.0
        %800 = vmatpush.msra.mxu0 0.0
        %801 = vmatpush.msra.mxu0 0.0
        %802 = vmatpush.msra.mxu0 0.0
        %803 = vmatpush.msra.mxu0 %v782
        %804 = vmatpush.msra.mxu0 %v781
        %805 = vmatpush.msra.mxu0 %v780
        %806 = vmatpush.msra.mxu0 %v779
        %807 = vmatmul.f32.gmra.mxu0 %v789
        %v808 = vpop.f32.mrf.mxu0
        %v809 = vadd.f32 %v785, %v808
        %810 = vdwg.mxu0
        %v811 = vld [vmem:[%s7] sm:$0xff]
        %v812 = vld [vmem:[%s7 + $0x8] sm:$0xff]
        %v813 = vld [vmem:[%s7 + $0x10] sm:$0xff]
        %v814 = vld [vmem:[%s7 + $0x18] sm:$0xff]
        %v815 = vld [vmem:[%s8] sm:$0x1]
        %v817 = vperm.slane %v815, 0
        %v819 = vadd.f32 %v817, 0.0
        %v820 = vmul.f32 %v809, 0.25
        %822 = vrot.lane.b32.xlu0 %v809, 96
        %v823 = vpop.permute.xlu0 %822
        %vm824 = vcmask 130048
        %v826 = vsel %vm824, %v820, 0
        %v828 = vsel %vm824, %v823, 0
        %830 = vmatpush.xpose.msra.mxu0 0.0
        %831 = vmatpush.xpose.msra.mxu0 0.0
        %832 = vmatpush.xpose.msra.mxu0 0.0
        %833 = vmatpush.xpose.msra.mxu0 0.0
        %834 = vmatpush.xpose.msra.mxu0 0.0
        %835 = vmatpush.xpose.msra.mxu0 0.0
        %836 = vmatpush.xpose.msra.mxu0 0.0
        %837 = vmatpush.xpose.msra.mxu0 0.0
        %838 = vmatpush.xpose.msra.mxu0 0.0
        %839 = vmatpush.xpose.msra.mxu0 0.0
        %840 = vmatpush.xpose.msra.mxu0 0.0
        %841 = vmatpush.xpose.msra.mxu0 0.0
        %842 = vmatpush.xpose.msra.mxu0 0.0
        %843 = vmatpush.xpose.msra.mxu0 0.0
        %844 = vmatpush.xpose.msra.mxu0 0.0
        %845 = vmatpush.xpose.msra.mxu0 %v828
        %846 = vmatmul.f32.gmra.mxu0 %v826
        %v847 = vpop.f32.mrf.mxu0
        %v848 = vadd.f32 0.0, %v847
        %849 = vdwg.mxu0
        %vm850 = vcmask 46080
        %v851 = vsel %vm850, %v848, -inf
        %852 = vmax.xlane.f32.xlu0 %v851
        %v853 = vpop.xlane.xlu0 %852
        %v854 = vsub.f32 %v848, %v853
        %v855 = vmul.f32 %v854, 1.442695
        %v856 = vpow.pop %v855
        %v857 = vsel %vm850, %v856, 0.0
        %858 = vadd.xlane.f32.xlu0 %v857
        %v859 = vpop.xlane.xlu0 %858
        %v860 = vrcp.pop %v859
        %v861 = vmul.f32 %v856, %v860
        %862 = vrot.lane.b32.xlu0 %v809, 64
        %v863 = vpop.permute.xlu0 %862
        %vm864 = vcmask 48128
        %v866 = vsel %vm864, %v861, 0
        %vm868 = vcmask 1045504
        %v869 = vsel %vm868, %v863, 0
        %871 = vmatpush.msra.mxu0 0.0
        %872 = vmatpush.msra.mxu0 0.0
        %873 = vmatpush.msra.mxu0 0.0
        %874 = vmatpush.msra.mxu0 0.0
        %875 = vmatpush.msra.mxu0 0.0
        %876 = vmatpush.msra.mxu0 0.0
        %877 = vmatpush.msra.mxu0 0.0
        %878 = vmatpush.msra.mxu0 0.0
        %879 = vmatpush.msra.mxu0 0.0
        %880 = vmatpush.msra.mxu0 0.0
        %881 = vmatpush.msra.mxu0 0.0
        %882 = vmatpush.msra.mxu0 0.0
        %883 = vmatpush.msra.mxu0 0.0
        %884 = vmatpush.msra.mxu0 0.0
        %885 = vmatpush.msra.mxu0 0.0
        %886 = vmatpush.msra.mxu0 %v869
        %887 = vmatmul.f32.gmra.mxu0 %v866
        %v888 = vpop.f32.mrf.mxu0
        %v889 = vadd.f32 0.0, %v888
        %890 = vdwg.mxu0
        %v892 = vsel %vm824, %v889, 0
        %894 = vmatpush.msra.mxu0 0.0
        %895 = vmatpush.msra.mxu0 0.0
        %896 = vmatpush.msra.mxu0 0.0
        %897 = vmatpush.msra.mxu0 0.0
        %898 = vmatpush.msra.mxu0 0.0
        %899 = vmatpush.msra.mxu0 0.0
        %900 = vmatpush.msra.mxu0 0.0
        %901 = vmatpush.msra.mxu0 0.0
        %902 = vmatpush.msra.mxu0 0.0
        %903 = vmatpush.msra.mxu0 0.0
        %904 = vmatpush.msra.mxu0 0.0
        %905 = vmatpush.msra.mxu0 0.0
        %906 = vmatpush.msra.mxu0 0.0
        %907 = vmatpush.msra.mxu0 0.0
        %908 = vmatpush.msra.mxu0 %v812
        %909 = vmatpush.msra.mxu0 %v811
        %910 = vmatmul.f32.gmra.mxu0 %v892
        %v911 = vpop.f32.mrf.mxu0
        %v912 = vadd.f32 0.0, %v911
        %913 = vdwg.mxu0
        %v914 = vadd.f32 %v819, %v912
        %915 = vrot.lane.b32.xlu0 %v820, 112
        %v916 = vpop.permute.xlu0 %915
        %917 = vrot.lane.b32.xlu0 %v809, 80
        %v918 = vpop.permute.xlu0 %917
        %v919 = vsel %vm824, %v916, 0
        %v921 = vsel %vm824, %v918, 0
        %923 = vmatpush.xpose.msra.mxu0 0.0
        %924 = vmatpush.xpose.msra.mxu0 0.0
        %925 = vmatpush.xpose.msra.mxu0 0.0
        %926 = vmatpush.xpose.msra.mxu0 0.0
        %927 = vmatpush.xpose.msra.mxu0 0.0
        %928 = vmatpush.xpose.msra.mxu0 0.0
        %929 = vmatpush.xpose.msra.mxu0 0.0
        %930 = vmatpush.xpose.msra.mxu0 0.0
        %931 = vmatpush.xpose.msra.mxu0 0.0
        %932 = vmatpush.xpose.msra.mxu0 0.0
        %933 = vmatpush.xpose.msra.mxu0 0.0
        %934 = vmatpush.xpose.msra.mxu0 0.0
        %935 = vmatpush.xpose.msra.mxu0 0.0
        %936 = vmatpush.xpose.msra.mxu0 0.0
        %937 = vmatpush.xpose.msra.mxu0 0.0
        %938 = vmatpush.xpose.msra.mxu0 %v921
        %939 = vmatmul.f32.gmra.mxu0 %v919
        %v940 = vpop.f32.mrf.mxu0
        %v941 = vadd.f32 0.0, %v940
        %942 = vdwg.mxu0
        %v943 = vsel %vm850, %v941, -inf
        %944 = vmax.xlane.f32.xlu0 %v943
        %v945 = vpop.xlane.xlu0 %944
        %v946 = vsub.f32 %v941, %v945
        %v947 = vmul.f32 %v946, 1.442695
        %v948 = vpow.pop %v947
        %v949 = vsel %vm850, %v948, 0.0
        %950 = vadd.xlane.f32.xlu0 %v949
        %v951 = vpop.xlane.xlu0 %950
        %v952 = vrcp.pop %v951
        %v953 = vmul.f32 %v948, %v952
        %954 = vrot.lane.b32.xlu0 %v809, 48
        %v955 = vpop.permute.xlu0 %954
        %v957 = vsel %vm864, %v953, 0
        %v959 = vsel %vm868, %v955, 0
        %961 = vmatpush.msra.mxu0 0.0
        %962 = vmatpush.msra.mxu0 0.0
        %963 = vmatpush.msra.mxu0 0.0
        %964 = vmatpush.msra.mxu0 0.0
        %965 = vmatpush.msra.mxu0 0.0
        %966 = vmatpush.msra.mxu0 0.0
        %967 = vmatpush.msra.mxu0 0.0
        %968 = vmatpush.msra.mxu0 0.0
        %969 = vmatpush.msra.mxu0 0.0
        %970 = vmatpush.msra.mxu0 0.0
        %971 = vmatpush.msra.mxu0 0.0
        %972 = vmatpush.msra.mxu0 0.0
        %973 = vmatpush.msra.mxu0 0.0
        %974 = vmatpush.msra.mxu0 0.0
        %975 = vmatpush.msra.mxu0 0.0
        %976 = vmatpush.msra.mxu0 %v959
        %977 = vmatmul.f32.gmra.mxu0 %v957
        %v978 = vpop.f32.mrf.mxu0
        %v979 = vadd.f32 0.0, %v978
        %980 = vdwg.mxu0
        %v982 = vsel %vm824, %v979, 0
        %984 = vmatpush.msra.mxu0 0.0
        %985 = vmatpush.msra.mxu0 0.0
        %986 = vmatpush.msra.mxu0 0.0
        %987 = vmatpush.msra.mxu0 0.0
        %988 = vmatpush.msra.mxu0 0.0
        %989 = vmatpush.msra.mxu0 0.0
        %990 = vmatpush.msra.mxu0 0.0
        %991 = vmatpush.msra.mxu0 0.0
        %992 = vmatpush.msra.mxu0 0.0
        %993 = vmatpush.msra.mxu0 0.0
        %994 = vmatpush.msra.mxu0 0.0
        %995 = vmatpush.msra.mxu0 0.0
        %996 = vmatpush.msra.mxu0 0.0
        %997 = vmatpush.msra.mxu0 0.0
        %998 = vmatpush.msra.mxu0 %v814
        %999 = vmatpush.msra.mxu0 %v813
        %1000 = vmatmul.f32.gmra.mxu0 %v982
        %v1001 = vpop.f32.mrf.mxu0
        %v1002 = vadd.f32 0.0, %v1001
        %1003 = vdwg.mxu0
        %v1004 = vadd.f32 %v914, %v1002
        %v1005 = vadd.f32 %v737, %v1004
        %v1006 = vld [vmem:[%s9] sm:$0x1]
        %v1007 = vld [vmem:[%s10] sm:$0x1]
        %v1008 = vsel %vm741, %v1005, 0.0
        %1009 = vadd.xlane.f32.xlu0 %v1008
        %v1010 = vpop.xlane.xlu0 %1009
        %v1011 = vmul.f32 %v1010, %v751
        %v1012 = vsub.f32 %v1005, %v1011
        %v1013 = vmul.f32 %v1012, %v1012
        %v1014 = vsel %vm741, %v1013, 0.0
        %1015 = vadd.xlane.f32.xlu0 %v1014
        %v1016 = vpop.xlane.xlu0 %1015
        %v1017 = vmul.f32 %v1016, %v751
        %v1018 = vadd.f32 %v1017, 1e-06
        %v1019 = vrsqrt.pop %v1018
        %v1020 = vmul.f32 %v1019, %v1018
        %v1021 = vmul.f32 %v1020, %v1019
        %v1022 = vmul.f32 0.5, %v1021
        %v1023 = vsub.f32 1.5, %v1022
        %v1024 = vmul.f32 %v1019, %v1023
        %vm1025 = vweird.f32 %v1018
        %vm1026 = vweird.f32 %v1019
        %vm1027 = vmor %vm1025, %vm1026
        %v1028 = vsel %vm1027, %v1019, %v1024
        %v1029 = vmul.f32 %v1012, %v1028
        %v1031 = vperm.slane %v1006, 0
        %v1033 = vmul.f32 %v1029, %v1031
        %v1035 = vperm.slane %v1007, 0
        %v1037 = vadd.f32 %v1033, %v1035
        %v1038 = vld [vmem:[%s11] sm:$0xff]
        %v1039 = vld [vmem:[%s11 + $0x8] sm:$0xff]
        %v1040 = vld [vmem:[%s11 + $0x10] sm:$0xff]
        %v1041 = vld [vmem:[%s11 + $0x18] sm:$0xff]
        %v1042 = vld [vmem:[%s12] sm:$0x1]
        %v1044 = vperm.slane %v1042, 0
        %v1047 = vsel %vm787, %v1037, 0
        %1049 = vmatpush.msra.mxu0 0.0
        %1050 = vmatpush.msra.mxu0 0.0
        %1051 = vmatpush.msra.mxu0 0.0
        %1052 = vmatpush.msra.mxu0 0.0
        %1053 = vmatpush.msra.mxu0 0.0
        %1054 = vmatpush.msra.mxu0 0.0
        %1055 = vmatpush.msra.mxu0 0.0
        %1056 = vmatpush.msra.mxu0 0.0
        %1057 = vmatpush.msra.mxu0 0.0
        %1058 = vmatpush.msra.mxu0 0.0
        %1059 = vmatpush.msra.mxu0 0.0
        %1060 = vmatpush.msra.mxu0 0.0
        %1061 = vmatpush.msra.mxu0 %v1041
        %1062 = vmatpush.msra.mxu0 %v1040
        %1063 = vmatpush.msra.mxu0 %v1039
        %1064 = vmatpush.msra.mxu0 %v1038
        %1065 = vmatmul.f32.gmra.mxu0 %v1047
        %v1066 = vpop.f32.mrf.mxu0
        %v1067 = vadd.f32 %v1044, %v1066
        %1068 = vdwg.mxu0
        %v1069 = vmul.f32 %v1067, 0.5
        %v1070 = vmul.f32 %v1067, 0.70710677
        %v1071 = vmul.f32 %v1070, %v1070
        %v1072 = vmin.f32 16.0, %v1071
        %v1073 = vmul.f32 %v1072, 2.1237322e-06
        %v1074 = vadd.f32 %v1073, 0.00028619796
        %v1075 = vmul.f32 %v1072, %v1074
        %v1076 = vadd.f32 %v1075, 0.0036580483
        %v1077 = vmul.f32 %v1072, %v1076
        %v1078 = vadd.f32 %v1077, 0.05243302
        %v1079 = vmul.f32 %v1072, %v1078
        %v1080 = vadd.f32 %v1079, 0.18741608
        %v1081 = vmul.f32 %v1072, %v1080
        %v1082 = vadd.f32 %v1081, 1.1283791
        %v1083 = vmul.f32 %v1070, %v1082
        %v1084 = vmul.f32 %v1072, 3.8918573e-05
        %v1085 = vadd.f32 %v1084, 0.001143296
        %v1086 = vmul.f32 %v1072, %v1085
        %v1087 = vadd.f32 %v1086, 0.014752088
        %v1088 = vmul.f32 %v1072, %v1087
        %v1089 = vadd.f32 %v1088, 0.112945676
        %v1090 = vmul.f32 %v1072, %v1089
        %v1091 = vadd.f32 %v1090, 0.4994258
        %v1092 = vmul.f32 %v1072, %v1091
        %v1093 = vadd.f32 %v1092, 1.0
        %v1094 = vrcp.pop %v1093
        %v1095 = vmul.f32 %v1093, %v1094
        %v1096 = vsub.f32 1.0, %v1095
        %v1097 = vmul.f32 %v1094, %v1096
        %v1098 = vadd.f32 %v1094, %v1097
        %vm1099 = vweird.f32 %v1093
        %vm1100 = vweird.f32 %v1094
        %vm1101 = vmor %vm1099, %vm1100
        %v1102 = vsel %vm1101, %v1094, %v1098
        %v1103 = vand.u32 2147483647, %v1093
        %vm1104 = vcmp.eq.f32.partialorder %v1103, 8.507059e+37
        %v1105 = vand.u32 %v1093, 2147483648
        %v1106 = vor.u32 1.1754944e-38, %v1105
        %v1107 = vsel %vm1104, %v1106, %v1102
        %v1108 = vmul.f32 %v1083, %v1107
        %v1109 = vmin.f32 %v1108, 1.0
        %v1110 = vmax.f32 %v1109, -1.0
        %v1111 = vadd.f32 %v1110, 1.0
        %v1112 = vmul.f32 %v1069, %v1111
        %v1113 = vld [vmem:[%s13] sm:$0xff]
        %v1114 = vld [vmem:[%s13 + $0x8] sm:$0xff]
        %v1115 = vld [vmem:[%s13 + $0x10] sm:$0xff]
        %v1116 = vld [vmem:[%s13 + $0x18] sm:$0xff]
        %v1117 = vld [vmem:[%s13 + $0x20] sm:$0xff]
        %v1118 = vld [vmem:[%s13 + $0x28] sm:$0xff]
        %v1119 = vld [vmem:[%s13 + $0x30] sm:$0xff]
        %v1120 = vld [vmem:[%s13 + $0x38] sm:$0xff]
        %vm1121 = vcmask 523264
        %v1123 = vsel %vm1121, %v1112, 0
        %1125 = vmatpush.msra.mxu0 0.0
        %1126 = vmatpush.msra.mxu0 0.0
        %1127 = vmatpush.msra.mxu0 0.0
        %1128 = vmatpush.msra.mxu0 0.0
        %1129 = vmatpush.msra.mxu0 0.0
        %1130 = vmatpush.msra.mxu0 0.0
        %1131 = vmatpush.msra.mxu0 0.0
        %1132 = vmatpush.msra.mxu0 0.0
        %1133 = vmatpush.msra.mxu0 %v1120
        %1134 = vmatpush.msra.mxu0 %v1119
        %1135 = vmatpush.msra.mxu0 %v1118
        %1136 = vmatpush.msra.mxu0 %v1117
        %1137 = vmatpush.msra.mxu0 %v1116
        %1138 = vmatpush.msra.mxu0 %v1115
        %1139 = vmatpush.msra.mxu0 %v1114
        %1140 = vmatpush.msra.mxu0 %v1113
        %1141 = vmatmul.f32.gmra.mxu0 %v1123
        %v1142 = vpop.f32.mrf.mxu0
        %v1143 = vadd.f32 0.0, %v1142
        %1144 = vdwg.mxu0
        %v1145 = vadd.f32 %v1005, %v1143
        %v1146 = vld [vmem:[%s14] sm:$0x1]
        %v1148 = vperm.slane %v1146, 0
        %v1150 = vadd.f32 %v1145, %v1148
        %s1151 = scalar_lea.vmem %s3, 1
        %v1152 = vld [vmem:[%s1151] sm:$0x1]
        %s1153 = scalar_lea.vmem %s4, 1
        %v1154 = vld [vmem:[%s1153] sm:$0x1]
        %v1155 = vsel %vm741, %v1150, 0.0
        %1156 = vadd.xlane.f32.xlu0 %v1155
        %v1157 = vpop.xlane.xlu0 %1156
        %v1158 = vmul.f32 %v1157, %v751
        %v1159 = vsub.f32 %v1150, %v1158
        %v1160 = vmul.f32 %v1159, %v1159
        %v1161 = vsel %vm741, %v1160, 0.0
        %1162 = vadd.xlane.f32.xlu0 %v1161
        %v1163 = vpop.xlane.xlu0 %1162
        %v1164 = vmul.f32 %v1163, %v751
        %v1165 = vadd.f32 %v1164, 1e-06
        %v1166 = vrsqrt.pop %v1165
        %v1167 = vmul.f32 %v1166, %v1165
        %v1168 = vmul.f32 %v1167, %v1166
        %v1169 = vmul.f32 0.5, %v1168
        %v1170 = vsub.f32 1.5, %v1169
        %v1171 = vmul.f32 %v1166, %v1170
        %vm1172 = vweird.f32 %v1165
        %vm1173 = vweird.f32 %v1166
        %vm1174 = vmor %vm1172, %vm1173
        %v1175 = vsel %vm1174, %v1166, %v1171
        %v1176 = vmul.f32 %v1159, %v1175
        %v1178 = vperm.slane %v1152, 0
        %v1180 = vmul.f32 %v1176, %v1178
        %v1182 = vperm.slane %v1154, 0
        %v1184 = vadd.f32 %v1180, %v1182
        %s1185 = scalar_lea.vmem %s5, 32
        %v1186 = vld [vmem:[%s1185] sm:$0xff]
        %v1187 = vld [vmem:[%s1185 + $0x8] sm:$0xff]
        %v1188 = vld [vmem:[%s1185 + $0x10] sm:$0xff]
        %v1189 = vld [vmem:[%s1185 + $0x18] sm:$0xff]
        %s1190 = scalar_lea.vmem %s6, 1
        %v1191 = vld [vmem:[%s1190] sm:$0x1]
        %v1193 = vperm.slane %v1191, 0
        %v1196 = vsel %vm787, %v1184, 0
        %1198 = vmatpush.msra.mxu0 0.0
        %1199 = vmatpush.msra.mxu0 0.0
        %1200 = vmatpush.msra.mxu0 0.0
        %1201 = vmatpush.msra.mxu0 0.0
        %1202 = vmatpush.msra.mxu0 0.0
        %1203 = vmatpush.msra.mxu0 0.0
        %1204 = vmatpush.msra.mxu0 0.0
        %1205 = vmatpush.msra.mxu0 0.0
        %1206 = vmatpush.msra.mxu0 0.0
        %1207 = vmatpush.msra.mxu0 0.0
        %1208 = vmatpush.msra.mxu0 0.0
        %1209 = vmatpush.msra.mxu0 0.0
        %1210 = vmatpush.msra.mxu0 %v1189
        %1211 = vmatpush.msra.mxu0 %v1188
        %1212 = vmatpush.msra.mxu0 %v1187
        %1213 = vmatpush.msra.mxu0 %v1186
        %1214 = vmatmul.f32.gmra.mxu0 %v1196
        %v1215 = vpop.f32.mrf.mxu0
        %v1216 = vadd.f32 %v1193, %v1215
        %1217 = vdwg.mxu0
        %s1218 = scalar_lea.vmem %s7, 32
        %v1219 = vld [vmem:[%s1218] sm:$0xff]
        %v1220 = vld [vmem:[%s1218 + $0x8] sm:$0xff]
        %v1221 = vld [vmem:[%s1218 + $0x10] sm:$0xff]
        %v1222 = vld [vmem:[%s1218 + $0x18] sm:$0xff]
        %s1223 = scalar_lea.vmem %s8, 1
        %v1224 = vld [vmem:[%s1223] sm:$0x1]
        %v1226 = vperm.slane %v1224, 0
        %v1228 = vadd.f32 %v1226, 0.0
        %v1229 = vmul.f32 %v1216, 0.25
        %1231 = vrot.lane.b32.xlu0 %v1216, 96
        %v1232 = vpop.permute.xlu0 %1231
        %v1234 = vsel %vm824, %v1229, 0
        %v1236 = vsel %vm824, %v1232, 0
        %1238 = vmatpush.xpose.msra.mxu0 0.0
        %1239 = vmatpush.xpose.msra.mxu0 0.0
        %1240 = vmatpush.xpose.msra.mxu0 0.0
        %1241 = vmatpush.xpose.msra.mxu0 0.0
        %1242 = vmatpush.xpose.msra.mxu0 0.0
        %1243 = vmatpush.xpose.msra.mxu0 0.0
        %1244 = vmatpush.xpose.msra.mxu0 0.0
        %1245 = vmatpush.xpose.msra.mxu0 0.0
        %1246 = vmatpush.xpose.msra.mxu0 0.0
        %1247 = vmatpush.xpose.msra.mxu0 0.0
        %1248 = vmatpush.xpose.msra.mxu0 0.0
        %1249 = vmatpush.xpose.msra.mxu0 0.0
        %1250 = vmatpush.xpose.msra.mxu0 0.0
        %1251 = vmatpush.xpose.msra.mxu0 0.0
        %1252 = vmatpush.xpose.msra.mxu0 0.0
        %1253 = vmatpush.xpose.msra.mxu0 %v1236
        %1254 = vmatmul.f32.gmra.mxu0 %v1234
        %v1255 = vpop.f32.mrf.mxu0
        %v1256 = vadd.f32 0.0, %v1255
        %1257 = vdwg.mxu0
        %v1258 = vsel %vm850, %v1256, -inf
        %1259 = vmax.xlane.f32.xlu0 %v1258
        %v1260 = vpop.xlane.xlu0 %1259
        %v1261 = vsub.f32 %v1256, %v1260
        %v1262 = vmul.f32 %v1261, 1.442695
        %v1263 = vpow.pop %v1262
        %v1264 = vsel %vm850, %v1263, 0.0
        %1265 = vadd.xlane.f32.xlu0 %v1264
        %v1266 = vpop.xlane.xlu0 %1265
        %v1267 = vrcp.pop %v1266
        %v1268 = vmul.f32 %v1263, %v1267
        %1269 = vrot.lane.b32.xlu0 %v1216, 64
        %v1270 = vpop.permute.xlu0 %1269
        %v1272 = vsel %vm864, %v1268, 0
        %v1274 = vsel %vm868, %v1270, 0
        %1276 = vmatpush.msra.mxu0 0.0
        %1277 = vmatpush.msra.mxu0 0.0
        %1278 = vmatpush.msra.mxu0 0.0
        %1279 = vmatpush.msra.mxu0 0.0
        %1280 = vmatpush.msra.mxu0 0.0
        %1281 = vmatpush.msra.mxu0 0.0
        %1282 = vmatpush.msra.mxu0 0.0
        %1283 = vmatpush.msra.mxu0 0.0
        %1284 = vmatpush.msra.mxu0 0.0
        %1285 = vmatpush.msra.mxu0 0.0
        %1286 = vmatpush.msra.mxu0 0.0
        %1287 = vmatpush.msra.mxu0 0.0
        %1288 = vmatpush.msra.mxu0 0.0
        %1289 = vmatpush.msra.mxu0 0.0
        %1290 = vmatpush.msra.mxu0 0.0
        %1291 = vmatpush.msra.mxu0 %v1274
        %1292 = vmatmul.f32.gmra.mxu0 %v1272
        %v1293 = vpop.f32.mrf.mxu0
        %v1294 = vadd.f32 0.0, %v1293
        %1295 = vdwg.mxu0
        %v1297 = vsel %vm824, %v1294, 0
        %1299 = vmatpush.msra.mxu0 0.0
        %1300 = vmatpush.msra.mxu0 0.0
        %1301 = vmatpush.msra.mxu0 0.0
        %1302 = vmatpush.msra.mxu0 0.0
        %1303 = vmatpush.msra.mxu0 0.0
        %1304 = vmatpush.msra.mxu0 0.0
        %1305 = vmatpush.msra.mxu0 0.0
        %1306 = vmatpush.msra.mxu0 0.0
        %1307 = vmatpush.msra.mxu0 0.0
        %1308 = vmatpush.msra.mxu0 0.0
        %1309 = vmatpush.msra.mxu0 0.0
        %1310 = vmatpush.msra.mxu0 0.0
        %1311 = vmatpush.msra.mxu0 0.0
        %1312 = vmatpush.msra.mxu0 0.0
        %1313 = vmatpush.msra.mxu0 %v1220
        %1314 = vmatpush.msra.mxu0 %v1219
        %1315 = vmatmul.f32.gmra.mxu0 %v1297
        %v1316 = vpop.f32.mrf.mxu0
        %v1317 = vadd.f32 0.0, %v1316
        %1318 = vdwg.mxu0
        %v1319 = vadd.f32 %v1228, %v1317
        %1320 = vrot.lane.b32.xlu0 %v1229, 112
        %v1321 = vpop.permute.xlu0 %1320
        %1322 = vrot.lane.b32.xlu0 %v1216, 80
        %v1323 = vpop.permute.xlu0 %1322
        %v1324 = vsel %vm824, %v1321, 0
        %v1326 = vsel %vm824, %v1323, 0
        %1328 = vmatpush.xpose.msra.mxu0 0.0
        %1329 = vmatpush.xpose.msra.mxu0 0.0
        %1330 = vmatpush.xpose.msra.mxu0 0.0
        %1331 = vmatpush.xpose.msra.mxu0 0.0
        %1332 = vmatpush.xpose.msra.mxu0 0.0
        %1333 = vmatpush.xpose.msra.mxu0 0.0
        %1334 = vmatpush.xpose.msra.mxu0 0.0
        %1335 = vmatpush.xpose.msra.mxu0 0.0
        %1336 = vmatpush.xpose.msra.mxu0 0.0
        %1337 = vmatpush.xpose.msra.mxu0 0.0
        %1338 = vmatpush.xpose.msra.mxu0 0.0
        %1339 = vmatpush.xpose.msra.mxu0 0.0
        %1340 = vmatpush.xpose.msra.mxu0 0.0
        %1341 = vmatpush.xpose.msra.mxu0 0.0
        %1342 = vmatpush.xpose.msra.mxu0 0.0
        %1343 = vmatpush.xpose.msra.mxu0 %v1326
        %1344 = vmatmul.f32.gmra.mxu0 %v1324
        %v1345 = vpop.f32.mrf.mxu0
        %v1346 = vadd.f32 0.0, %v1345
        %1347 = vdwg.mxu0
        %v1348 = vsel %vm850, %v1346, -inf
        %1349 = vmax.xlane.f32.xlu0 %v1348
        %v1350 = vpop.xlane.xlu0 %1349
        %v1351 = vsub.f32 %v1346, %v1350
        %v1352 = vmul.f32 %v1351, 1.442695
        %v1353 = vpow.pop %v1352
        %v1354 = vsel %vm850, %v1353, 0.0
        %1355 = vadd.xlane.f32.xlu0 %v1354
        %v1356 = vpop.xlane.xlu0 %1355
        %v1357 = vrcp.pop %v1356
        %v1358 = vmul.f32 %v1353, %v1357
        %1359 = vrot.lane.b32.xlu0 %v1216, 48
        %v1360 = vpop.permute.xlu0 %1359
        %v1362 = vsel %vm864, %v1358, 0
        %v1364 = vsel %vm868, %v1360, 0
        %1366 = vmatpush.msra.mxu0 0.0
        %1367 = vmatpush.msra.mxu0 0.0
        %1368 = vmatpush.msra.mxu0 0.0
        %1369 = vmatpush.msra.mxu0 0.0
        %1370 = vmatpush.msra.mxu0 0.0
        %1371 = vmatpush.msra.mxu0 0.0
        %1372 = vmatpush.msra.mxu0 0.0
        %1373 = vmatpush.msra.mxu0 0.0
        %1374 = vmatpush.msra.mxu0 0.0
        %1375 = vmatpush.msra.mxu0 0.0
        %1376 = vmatpush.msra.mxu0 0.0
        %1377 = vmatpush.msra.mxu0 0.0
        %1378 = vmatpush.msra.mxu0 0.0
        %1379 = vmatpush.msra.mxu0 0.0
        %1380 = vmatpush.msra.mxu0 0.0
        %1381 = vmatpush.msra.mxu0 %v1364
        %1382 = vmatmul.f32.gmra.mxu0 %v1362
        %v1383 = vpop.f32.mrf.mxu0
        %v1384 = vadd.f32 0.0, %v1383
        %1385 = vdwg.mxu0
        %v1387 = vsel %vm824, %v1384, 0
        %1389 = vmatpush.msra.mxu0 0.0
        %1390 = vmatpush.msra.mxu0 0.0
        %1391 = vmatpush.msra.mxu0 0.0
        %1392 = vmatpush.msra.mxu0 0.0
        %1393 = vmatpush.msra.mxu0 0.0
        %1394 = vmatpush.msra.mxu0 0.0
        %1395 = vmatpush.msra.mxu0 0.0
        %1396 = vmatpush.msra.mxu0 0.0
        %1397 = vmatpush.msra.mxu0 0.0
        %1398 = vmatpush.msra.mxu0 0.0
        %1399 = vmatpush.msra.mxu0 0.0
        %1400 = vmatpush.msra.mxu0 0.0
        %1401 = vmatpush.msra.mxu0 0.0
        %1402 = vmatpush.msra.mxu0 0.0
        %1403 = vmatpush.msra.mxu0 %v1222
        %1404 = vmatpush.msra.mxu0 %v1221
        %1405 = vmatmul.f32.gmra.mxu0 %v1387
        %v1406 = vpop.f32.mrf.mxu0
        %v1407 = vadd.f32 0.0, %v1406
        %1408 = vdwg.mxu0
        %v1409 = vadd.f32 %v1319, %v1407
        %v1410 = vadd.f32 %v1150, %v1409
        %s1411 = scalar_lea.vmem %s9, 1
        %v1412 = vld [vmem:[%s1411] sm:$0x1]
        %s1413 = scalar_lea.vmem %s10, 1
        %v1414 = vld [vmem:[%s1413] sm:$0x1]
        %v1415 = vsel %vm741, %v1410, 0.0
        %1416 = vadd.xlane.f32.xlu0 %v1415
        %v1417 = vpop.xlane.xlu0 %1416
        %v1418 = vmul.f32 %v1417, %v751
        %v1419 = vsub.f32 %v1410, %v1418
        %v1420 = vmul.f32 %v1419, %v1419
        %v1421 = vsel %vm741, %v1420, 0.0
        %1422 = vadd.xlane.f32.xlu0 %v1421
        %v1423 = vpop.xlane.xlu0 %1422
        %v1424 = vmul.f32 %v1423, %v751
        %v1425 = vadd.f32 %v1424, 1e-06
        %v1426 = vrsqrt.pop %v1425
        %v1427 = vmul.f32 %v1426, %v1425
        %v1428 = vmul.f32 %v1427, %v1426
        %v1429 = vmul.f32 0.5, %v1428
        %v1430 = vsub.f32 1.5, %v1429
        %v1431 = vmul.f32 %v1426, %v1430
        %vm1432 = vweird.f32 %v1425
        %vm1433 = vweird.f32 %v1426
        %vm1434 = vmor %vm1432, %vm1433
        %v1435 = vsel %vm1434, %v1426, %v1431
        %v1436 = vmul.f32 %v1419, %v1435
        %v1438 = vperm.slane %v1412, 0
        %v1440 = vmul.f32 %v1436, %v1438
        %v1442 = vperm.slane %v1414, 0
        %v1444 = vadd.f32 %v1440, %v1442
        %s1445 = scalar_lea.vmem %s11, 32
        %v1446 = vld [vmem:[%s1445] sm:$0xff]
        %v1447 = vld [vmem:[%s1445 + $0x8] sm:$0xff]
        %v1448 = vld [vmem:[%s1445 + $0x10] sm:$0xff]
        %v1449 = vld [vmem:[%s1445 + $0x18] sm:$0xff]
        %s1450 = scalar_lea.vmem %s12, 1
        %v1451 = vld [vmem:[%s1450] sm:$0x1]
        %v1453 = vperm.slane %v1451, 0
        %v1456 = vsel %vm787, %v1444, 0
        %1458 = vmatpush.msra.mxu0 0.0
        %1459 = vmatpush.msra.mxu0 0.0
        %1460 = vmatpush.msra.mxu0 0.0
        %1461 = vmatpush.msra.mxu0 0.0
        %1462 = vmatpush.msra.mxu0 0.0
        %1463 = vmatpush.msra.mxu0 0.0
        %1464 = vmatpush.msra.mxu0 0.0
        %1465 = vmatpush.msra.mxu0 0.0
        %1466 = vmatpush.msra.mxu0 0.0
        %1467 = vmatpush.msra.mxu0 0.0
        %1468 = vmatpush.msra.mxu0 0.0
        %1469 = vmatpush.msra.mxu0 0.0
        %1470 = vmatpush.msra.mxu0 %v1449
        %1471 = vmatpush.msra.mxu0 %v1448
        %1472 = vmatpush.msra.mxu0 %v1447
        %1473 = vmatpush.msra.mxu0 %v1446
        %1474 = vmatmul.f32.gmra.mxu0 %v1456
        %v1475 = vpop.f32.mrf.mxu0
        %v1476 = vadd.f32 %v1453, %v1475
        %1477 = vdwg.mxu0
        %v1478 = vmul.f32 %v1476, 0.5
        %v1479 = vmul.f32 %v1476, 0.70710677
        %v1480 = vmul.f32 %v1479, %v1479
        %v1481 = vmin.f32 16.0, %v1480
        %v1482 = vmul.f32 %v1481, 2.1237322e-06
        %v1483 = vadd.f32 %v1482, 0.00028619796
        %v1484 = vmul.f32 %v1481, %v1483
        %v1485 = vadd.f32 %v1484, 0.0036580483
        %v1486 = vmul.f32 %v1481, %v1485
        %v1487 = vadd.f32 %v1486, 0.05243302
        %v1488 = vmul.f32 %v1481, %v1487
        %v1489 = vadd.f32 %v1488, 0.18741608
        %v1490 = vmul.f32 %v1481, %v1489
        %v1491 = vadd.f32 %v1490, 1.1283791
        %v1492 = vmul.f32 %v1479, %v1491
        %v1493 = vmul.f32 %v1481, 3.8918573e-05
        %v1494 = vadd.f32 %v1493, 0.001143296
        %v1495 = vmul.f32 %v1481, %v1494
        %v1496 = vadd.f32 %v1495, 0.014752088
        %v1497 = vmul.f32 %v1481, %v1496
        %v1498 = vadd.f32 %v1497, 0.112945676
        %v1499 = vmul.f32 %v1481, %v1498
        %v1500 = vadd.f32 %v1499, 0.4994258
        %v1501 = vmul.f32 %v1481, %v1500
        %v1502 = vadd.f32 %v1501, 1.0
        %v1503 = vrcp.pop %v1502
        %v1504 = vmul.f32 %v1502, %v1503
        %v1505 = vsub.f32 1.0, %v1504
        %v1506 = vmul.f32 %v1503, %v1505
        %v1507 = vadd.f32 %v1503, %v1506
        %vm1508 = vweird.f32 %v1502
        %vm1509 = vweird.f32 %v1503
        %vm1510 = vmor %vm1508, %vm1509
        %v1511 = vsel %vm1510, %v1503, %v1507
        %v1512 = vand.u32 2147483647, %v1502
        %vm1513 = vcmp.eq.f32.partialorder %v1512, 8.507059e+37
        %v1514 = vand.u32 %v1502, 2147483648
        %v1515 = vor.u32 1.1754944e-38, %v1514
        %v1516 = vsel %vm1513, %v1515, %v1511
        %v1517 = vmul.f32 %v1492, %v1516
        %v1518 = vmin.f32 %v1517, 1.0
        %v1519 = vmax.f32 %v1518, -1.0
        %v1520 = vadd.f32 %v1519, 1.0
        %v1521 = vmul.f32 %v1478, %v1520
        %s1522 = scalar_lea.vmem %s13, 64
        %v1523 = vld [vmem:[%s1522] sm:$0xff]
        %v1524 = vld [vmem:[%s1522 + $0x8] sm:$0xff]
        %v1525 = vld [vmem:[%s1522 + $0x10] sm:$0xff]
        %v1526 = vld [vmem:[%s1522 + $0x18] sm:$0xff]
        %v1527 = vld [vmem:[%s1522 + $0x20] sm:$0xff]
        %v1528 = vld [vmem:[%s1522 + $0x28] sm:$0xff]
        %v1529 = vld [vmem:[%s1522 + $0x30] sm:$0xff]
        %v1530 = vld [vmem:[%s1522 + $0x38] sm:$0xff]
        %v1532 = vsel %vm1121, %v1521, 0
        %1534 = vmatpush.msra.mxu0 0.0
        %1535 = vmatpush.msra.mxu0 0.0
        %1536 = vmatpush.msra.mxu0 0.0
        %1537 = vmatpush.msra.mxu0 0.0
        %1538 = vmatpush.msra.mxu0 0.0
        %1539 = vmatpush.msra.mxu0 0.0
        %1540 = vmatpush.msra.mxu0 0.0
        %1541 = vmatpush.msra.mxu0 0.0
        %1542 = vmatpush.msra.mxu0 %v1530
        %1543 = vmatpush.msra.mxu0 %v1529
        %1544 = vmatpush.msra.mxu0 %v1528
        %1545 = vmatpush.msra.mxu0 %v1527
        %1546 = vmatpush.msra.mxu0 %v1526
        %1547 = vmatpush.msra.mxu0 %v1525
        %1548 = vmatpush.msra.mxu0 %v1524
        %1549 = vmatpush.msra.mxu0 %v1523
        %1550 = vmatmul.f32.gmra.mxu0 %v1532
        %v1551 = vpop.f32.mrf.mxu0
        %v1552 = vadd.f32 0.0, %v1551
        %1553 = vdwg.mxu0
        %v1554 = vadd.f32 %v1410, %v1552
        %s1555 = scalar_lea.vmem %s14, 1
        %v1556 = vld [vmem:[%s1555] sm:$0x1]
        %v1558 = vperm.slane %v1556, 0
        %v1560 = vadd.f32 %v1554, %v1558
        %v1561 = vld [vmem:[%s15] sm:$0x1]
        %v1562 = vld [vmem:[%s16] sm:$0x1]
        %v1563 = vsel %vm741, %v1560, 0.0
        %1564 = vadd.xlane.f32.xlu0 %v1563
        %v1565 = vpop.xlane.xlu0 %1564
        %v1566 = vmul.f32 %v1565, %v751
        %v1567 = vsub.f32 %v1560, %v1566
        %v1568 = vmul.f32 %v1567, %v1567
        %v1569 = vsel %vm741, %v1568, 0.0
        %1570 = vadd.xlane.f32.xlu0 %v1569
        %v1571 = vpop.xlane.xlu0 %1570
        %v1572 = vmul.f32 %v1571, %v751
        %v1573 = vadd.f32 %v1572, 1e-06
        %v1574 = vrsqrt.pop %v1573
        %v1575 = vmul.f32 %v1574, %v1573
        %v1576 = vmul.f32 %v1575, %v1574
        %v1577 = vmul.f32 0.5, %v1576
        %v1578 = vsub.f32 1.5, %v1577
        %v1579 = vmul.f32 %v1574, %v1578
        %vm1580 = vweird.f32 %v1573
        %vm1581 = vweird.f32 %v1574
        %vm1582 = vmor %vm1580, %vm1581
        %v1583 = vsel %vm1582, %v1574, %v1579
        %v1584 = vmul.f32 %v1567, %v1583
        %v1586 = vperm.slane %v1561, 0
        %v1588 = vmul.f32 %v1584, %v1586
        %v1590 = vperm.slane %v1562, 0
        %v1592 = vadd.f32 %v1588, %v1590
        %v1593 = vld [vmem:[%s17] sm:$0xff]
        %v1594 = vld [vmem:[%s17 + $0x8] sm:$0xff]
        %v1595 = vld [vmem:[%s17 + $0x10] sm:$0xff]
        %v1596 = vld [vmem:[%s17 + $0x18] sm:$0xff]
        %v1597 = vld [vmem:[%s18] sm:$0xff]
        %v1598 = vld [vmem:[%s18 + $0x8] sm:$0xff]
        %v1599 = vld [vmem:[%s18 + $0x10] sm:$0xff]
        %v1600 = vld [vmem:[%s18 + $0x18] sm:$0xff]
        %v1602 = vrot.slane %v1592, 1
        %v1603 = vsel %vm787, %v1602, 0
        %1605 = vmatpush.msra.mxu0 0.0
        %1606 = vmatpush.msra.mxu0 0.0
        %1607 = vmatpush.msra.mxu0 0.0
        %1608 = vmatpush.msra.mxu0 0.0
        %1609 = vmatpush.msra.mxu0 0.0
        %1610 = vmatpush.msra.mxu0 0.0
        %1611 = vmatpush.msra.mxu0 0.0
        %1612 = vmatpush.msra.mxu0 0.0
        %1613 = vmatpush.msra.mxu0 0.0
        %1614 = vmatpush.msra.mxu0 0.0
        %1615 = vmatpush.msra.mxu0 0.0
        %1616 = vmatpush.msra.mxu0 0.0
        %1617 = vmatpush.msra.mxu0 %v1600
        %1618 = vmatpush.msra.mxu0 %v1599
        %1619 = vmatpush.msra.mxu0 %v1598
        %1620 = vmatpush.msra.mxu0 %v1597
        %1621 = vmatmul.f32.gmra.mxu0 %v1603
        %v1622 = vpop.f32.mrf.mxu0
        %v1623 = vadd.f32 0.0, %v1622
        %1624 = vdwg.mxu0
        %v1625 = vsel %vm787, %v1592, 0
        %1627 = vmatpush.msra.mxu0 0.0
        %1628 = vmatpush.msra.mxu0 0.0
        %1629 = vmatpush.msra.mxu0 0.0
        %1630 = vmatpush.msra.mxu0 0.0
        %1631 = vmatpush.msra.mxu0 0.0
        %1632 = vmatpush.msra.mxu0 0.0
        %1633 = vmatpush.msra.mxu0 0.0
        %1634 = vmatpush.msra.mxu0 0.0
        %1635 = vmatpush.msra.mxu0 0.0
        %1636 = vmatpush.msra.mxu0 0.0
        %1637 = vmatpush.msra.mxu0 0.0
        %1638 = vmatpush.msra.mxu0 0.0
        %1639 = vmatpush.msra.mxu0 %v1596
        %1640 = vmatpush.msra.mxu0 %v1595
        %1641 = vmatpush.msra.mxu0 %v1594
        %1642 = vmatpush.msra.mxu0 %v1593
        %1643 = vmatmul.f32.gmra.mxu0 %v1625
        %v1644 = vpop.f32.mrf.mxu0
        %v1645 = vadd.f32 %v1623, %v1644
        %1646 = vdwg.mxu0
        %v1647 = vld [vmem:[%s19] sm:$0x1]
        %v1648 = vadd.f32 %v1645, %v1647
        %v1649 = vmul.f32 %v1648, 0.5
        %vm1650 = vcmask 73728
        %1651 = vst.msk [vmem:[%s621] sm:$0x1] %vm1650, %v1649
        %s1652 = sand.u32 %s467, 1
        %s1653 = scalar_lea.sflag [#allocation3], %s1652
        %s1654 = sand.u32 %s467, 1
        %s1655 = scalar_lea.vmem [#allocation2], %s1654
        // Predicated region
        $region101: #{forward.1} parent=99 // pred_check
          %p1656 = pneg %p477
        $region102: #{forward.1} parent=99 // pred_check_branch
          %1658 = sbr.rel (%p1656) target = $region104
        $region103: #{forward.1} parent=99 // pred_region
          %1660 = vsyncadd %s1653, 0
          %s1661 = scalar_lea.hbm %s20, %s34
          %s1663 = sshll.u32 %s1655, 4
          %s1664 = int_to_ptr.vmem [resolvable:$true] %s1663
          %s1665 = sshll.u32 %s1661, 4
          %s1666 = int_to_ptr.hbm [resolvable:$true] %s1665
          %1668 = dma.vmem_to_hbm [thread:$0]  %s1664, 16, %s1666, %s1653
        $region104: #{forward.1} parent=99 // pred_fallthru
          _
      $region100: #{forward.1} parent=5 // pred_fallthru
        _
      %p1669 = scmp.le.s32.totalorder 2, %s29
      // Predicated region
      $region105: #{forward.1} parent=5 // pred_check
        %p1670 = pneg %p1669
      $region106: #{forward.1} parent=5 // pred_check_branch
        %1672 = sbr.rel (%p1670) target = $region108
      $region107: #{forward.1} parent=5 // pred_region
        %s1673 = ssub.s32 %s29, 2
        // Predicated region
        $region109: #{forward.1} parent=107 // pred_check
          %p1674 = pneg %p483
        $region110: #{forward.1} parent=107 // pred_check_branch
          %1676 = sbr.rel (%p1674) target = $region112
        $region111: #{forward.1} parent=107 // pred_region
          %s1677 = sand.u32 %s468, 1
          %s1678 = scalar_lea.sflag [#allocation3], %s1677
          %s1679 = sand.u32 %s468, 1
          %s1680 = scalar_lea.vmem [#allocation2], %s1679
          %1682 = dma.done %s1678, 16
        $region112: #{forward.1} parent=107 // pred_fallthru
          _
      $region108: #{forward.1} parent=5 // pred_fallthru
        _
    $region6: #{forward.1} parent=1 // loop_footer
      %s33 = sadd.s32 1, %s29
    $region7: #{forward.1} parent=1 // loop_footer_branch
      %28 = sbr.rel target = $region3
    $region8: #{forward.1} parent=1 // loop_exit
      _
    %1683 = vsyncpa [#allocation3], 1
    %s1684 = scalar_lea.sflag [#allocation3], 1
    %1685 = vsyncpa %s1684, 1

</llo_original>
